<compile_context>
chip_gen: v5e
topology: v5e:2x2
jax: 0.10.0
libtpu: 0.0.40
codegen_flags: <defaults>
</compile_context>

<pallas_src>
import functools
import math

import jax
import jax.numpy as jnp
from jax import lax
from jax.experimental import pallas as pl
from jax.experimental.pallas import tpu as pltpu


def _round_up(a, m):
    return ((a + m - 1) // m) * m


def _silu(x):
    # sigmoid lowers to the EUP (logistic); avoids a VPU divide sequence.
    return x * jax.nn.sigmoid(x)


def _softplus(x):
    # matches torch.nn.functional.softplus(beta=1, threshold=20)
    safe = jnp.minimum(x, 20.0)
    return jnp.where(x > 20.0, x, jnp.log1p(jnp.exp(safe)))


# ---------------------------------------------------------------------------
# Tiled linear (+ optional tanh):  o = act(x @ W + b), bf16 MXU / f32 accumulate
# ---------------------------------------------------------------------------
def _linear_kernel(x_ref, w_ref, b_ref, o_ref, acc_ref, *, activation, nk):
    @pl.when(pl.program_id(2) == 0)
    def _():
        acc_ref[...] = jnp.zeros_like(acc_ref)

    acc_ref[...] += jnp.dot(x_ref[...], w_ref[...],
                            preferred_element_type=jnp.float32)

    @pl.when(pl.program_id(2) == nk - 1)
    def _():
        y = acc_ref[...] + b_ref[...]
        if activation == "tanh":
            y = jnp.tanh(y)
        o_ref[...] = y.astype(o_ref.dtype)


def pad_linear_params(w, b):
    """Pad + cast a linear layer's weights ONCE at init (not per forward call)."""
    K, N = w.shape
    Kp, Np = _round_up(K, 128), _round_up(N, 128)
    wp = jnp.zeros((Kp, Np), jnp.bfloat16).at[:K, :N].set(w.astype(jnp.bfloat16))
    bp = jnp.zeros((1, Np), jnp.float32).at[0, :N].set(b.astype(jnp.float32))
    return wp, bp


def _pick_tile(t, dim):
    # dim is a multiple of 128; shrink t (by 128s) until it divides dim.
    t = min(t, dim)
    while dim % t != 0:
        t -= 128
    return t


def linear(x2d, wp, bp, n_out, activation=None, *, tm=512, tn=512, tk=1024):
    M, K = x2d.shape
    Kp, Np = wp.shape
    tn = _pick_tile(tn, Np)
    tk = _pick_tile(tk, Kp)
    tm = min(tm, _round_up(M, 8))
    Mp = _round_up(M, tm)

    if (M, K) != (Mp, Kp):
        # only the activation is padded per call (weights are pre-padded at init)
        xp = jnp.zeros((Mp, Kp), jnp.bfloat16).at[:M, :K].set(x2d.astype(jnp.bfloat16))
    else:
        xp = x2d.astype(jnp.bfloat16)

    nk = Kp // tk
    out = pl.pallas_call(
        functools.partial(_linear_kernel, activation=activation, nk=nk),
        out_shape=jax.ShapeDtypeStruct((Mp, Np), jnp.float32),
        grid_spec=pltpu.PrefetchScalarGridSpec(
            num_scalar_prefetch=0,
            grid=(Mp // tm, Np // tn, nk),
            in_specs=[
                pl.BlockSpec((tm, tk), lambda i, j, k: (i, k)),
                pl.BlockSpec((tk, tn), lambda i, j, k: (k, j)),
                pl.BlockSpec((1, tn), lambda i, j, k: (0, j)),
            ],
            out_specs=pl.BlockSpec((tm, tn), lambda i, j, k: (i, j)),
            scratch_shapes=[pltpu.VMEM((tm, tn), jnp.float32)],
        ),
        compiler_params=pltpu.CompilerParams(
            dimension_semantics=("parallel", "parallel", "arbitrary"),
            vmem_limit_bytes=64 * 1024 * 1024),
    )(xp, wp, bp)
    return out[:M, :n_out]


# ---------------------------------------------------------------------------
# Fused Mamba residual block (one batch element per grid step):
#   o = x + out_proj( SSM(SiLU(conv1d(in_proj_x(RMSNorm(x))))) * SiLU(in_proj_z(RMSNorm(x))) )
# ---------------------------------------------------------------------------
def _mamba_block_kernel(x_ref, rmsw_ref, ipx_ref, ipz_ref, convw_ref, convb_ref,
                        xpdt_ref, xpB_ref, xpC_ref, dtw_ref, dtb_ref,
                        alogt_ref, dparam_ref, outproj_ref, o_ref,
                        delta_scr, dxx_scr, bm_scr, cm_scr,
                        dA_scr, dBx_scr, h_scr, y_scr,
                        *, L, D, ED, N, dconv, dt_rank, LC):
    x = x_ref[0]                                               # (L, D) f32

    # --- RMSNorm (f32, eps = 1e-5, as in mambapy) ---
    ms = jnp.mean(x * x, axis=-1, keepdims=True)
    xn = x * lax.rsqrt(ms + 1e-5) * rmsw_ref[...]              # (L, D)
    xn_bf = xn.astype(jnp.bfloat16)

    # --- in_proj (bf16 MXU, f32 acc), pre-split x / z halves: lane-dense outputs ---
    xin = jnp.dot(xn_bf, ipx_ref[...], preferred_element_type=jnp.float32)   # (L, ED)
    z = jnp.dot(xn_bf, ipz_ref[...], preferred_element_type=jnp.float32)     # (L, ED)

    # --- causal depthwise conv1d via XLU sublane rolls + causal mask (f32, VPU) ---
    convw = convw_ref[...]                                     # (dconv, ED)
    row = lax.broadcasted_iota(jnp.int32, (L, 1), 0)
    acc = xin * convw[dconv - 1:dconv, :]
    for k in range(dconv - 1):                                 # static, tiny (dconv = 4)
        s = dconv - 1 - k
        shifted = pltpu.roll(xin, shift=s, axis=0)             # row t <- xin[t - s] (wraps)
        shifted = jnp.where(row >= s, shifted, 0.0)            # zero the wrapped rows
        acc = acc + shifted * convw[k:k + 1, :]
    xc = _silu(acc + convb_ref[...])                           # (L, ED) f32
    xc_bf = xc.astype(jnp.bfloat16)

    # --- x_proj (pre-split dt / B / C), dt_proj (+bias) -> softplus (f32) ---
    draw = jnp.dot(xc_bf, xpdt_ref[...], preferred_element_type=jnp.float32)      # (L, dt_rank)
    bm_scr[...] = jnp.dot(xc_bf, xpB_ref[...], preferred_element_type=jnp.float32)  # (L, N)
    cm_scr[...] = jnp.dot(xc_bf, xpC_ref[...], preferred_element_type=jnp.float32)  # (L, N)
    delta = _softplus(
        jnp.dot(draw.astype(jnp.bfloat16), dtw_ref[...],
                preferred_element_type=jnp.float32) + dtb_ref[...])                # (L, ED)
    delta_scr[...] = delta
    dxx_scr[...] = delta * xc

    A = -jnp.exp(alogt_ref[...])                               # (N, ED), ED on lanes (f32)

    # --- selective scan, chunked over L: h carried across chunks, dA/dBx materialized
    #     only per chunk, C contraction done per chunk (no full (L,N,ED) buffers) ---
    def chunk_body(c, h):
        t0 = pl.multiple_of(c * LC, LC)
        d_c = delta_scr[pl.ds(t0, LC), :]                      # (LC, ED)
        dx_c = dxx_scr[pl.ds(t0, LC), :]                       # (LC, ED)
        b_c = bm_scr[pl.ds(t0, LC), :]                         # (LC, N)
        c_c = cm_scr[pl.ds(t0, LC), :]                         # (LC, N)
        # hoist transcendentals / broadcasts out of the serial recurrence
        dA_scr[...] = jnp.exp(d_c[:, None, :] * A[None, :, :])        # (LC, N, ED)
        dBx_scr[...] = dx_c[:, None, :] * b_c[:, :, None]              # (LC, N, ED)

        def step(i, h):
            h = dA_scr[i] * h + dBx_scr[i]                     # pure VPU FMA on (N, ED)
            h_scr[i] = h
            return h

        h = lax.fori_loop(0, LC, step, h)
        # per-chunk C contraction (vectorized sublane reduce over N, off the serial path)
        y_scr[pl.ds(t0, LC), :] = jnp.sum(h_scr[...] * c_c[:, :, None], axis=1)
        return h

    lax.fori_loop(0, L // LC, chunk_body, jnp.zeros((N, ED), jnp.float32))

    y = y_scr[...] + dparam_ref[...] * xc                      # (L, ED)

    # --- gate with SiLU(z), out_proj (bf16 MXU, f32 acc), residual ---
    gated = (y * _silu(z)).astype(jnp.bfloat16)
    out = jnp.dot(gated, outproj_ref[...], preferred_element_type=jnp.float32)   # (L, D)
    o_ref[0] = (x + out).astype(o_ref.dtype)


def mamba_block(x, lp):
    B, L, D = x.shape
    N, ED = lp["A_log_t"].shape
    dconv = lp["conv_w"].shape[0]
    dt_rank = lp["dt_proj_w"].shape[0]
    LC = math.gcd(L, 64)        # scan chunk length (divides L); bounds scratch to (LC,N,ED)

    kern = functools.partial(_mamba_block_kernel, L=L, D=D, ED=ED, N=N,
                             dconv=dconv, dt_rank=dt_rank, LC=LC)

    def full(shape):
        nd = len(shape)
        return pl.BlockSpec(shape, lambda b, _nd=nd: (0,) * _nd)

    in_specs = [
        pl.BlockSpec((1, L, D), lambda b: (b, 0, 0)),   # x
        full((1, D)),                                   # rms_w (f32)
        full((D, ED)), full((D, ED)),                   # in_proj x / z (bf16)
        full((dconv, ED)), full((1, ED)),               # conv w / b (f32)
        full((ED, dt_rank)), full((ED, N)), full((ED, N)),  # x_proj dt / B / C (bf16)
        full((dt_rank, ED)), full((1, ED)),             # dt_proj w (bf16) / b (f32)
        full((N, ED)), full((1, ED)),                   # A_log_t, D (f32)
        full((ED, D)),                                  # out_proj (bf16)
    ]

    return pl.pallas_call(
        kern,
        out_shape=jax.ShapeDtypeStruct((B, L, D), jnp.float32),
        grid_spec=pltpu.PrefetchScalarGridSpec(
            num_scalar_prefetch=0,
            grid=(B,),
            in_specs=in_specs,
            out_specs=pl.BlockSpec((1, L, D), lambda b: (b, 0, 0)),
            scratch_shapes=[
                pltpu.VMEM((L, ED), jnp.float32),        # delta
                pltpu.VMEM((L, ED), jnp.float32),        # delta * x
                pltpu.VMEM((L, N), jnp.float32),         # B
                pltpu.VMEM((L, N), jnp.float32),         # C
                pltpu.VMEM((LC, N, ED), jnp.float32),    # dA   (chunk)
                pltpu.VMEM((LC, N, ED), jnp.float32),    # dBx  (chunk)
                pltpu.VMEM((LC, N, ED), jnp.float32),    # h    (chunk)
                pltpu.VMEM((L, ED), jnp.float32),        # y
            ],
        ),
        compiler_params=pltpu.CompilerParams(
            dimension_semantics=("parallel",),
            vmem_limit_bytes=64 * 1024 * 1024),
    )(x, lp["rms_w"],
      lp["in_proj_x_w"], lp["in_proj_z_w"],
      lp["conv_w"], lp["conv_b"],
      lp["x_proj_dt_w"], lp["x_proj_B_w"], lp["x_proj_C_w"],
      lp["dt_proj_w"], lp["dt_proj_b"],
      lp["A_log_t"], lp["D"],
      lp["out_proj_w"])


# ---------------------------------------------------------------------------
# Parameter init (deterministic, synthetic) and full forward
# ---------------------------------------------------------------------------
def init_params(key, in_dim, hidden, out_dim, n_layers,
                d_state=16, expand=2, d_conv=4):
    ED = expand * hidden
    dt_rank = math.ceil(hidden / 16)
    keys = iter(jax.random.split(key, 4 + 12 * n_layers))
    bf = jnp.bfloat16

    def nrm(shape, scale=0.1):
        return scale * jax.random.normal(next(keys), shape, dtype=jnp.float32)

    lin1_wp, lin1_bp = pad_linear_params(nrm((in_dim, hidden)), nrm((hidden,)))
    lin2_wp, lin2_bp = pad_linear_params(nrm((hidden, out_dim)), nrm((out_dim,)))
    params = {
        "lin1_wp": lin1_wp, "lin1_bp": lin1_bp,
        "lin2_wp": lin2_wp, "lin2_bp": lin2_bp,
        "layers": [],
    }
    # A_log stored transposed (N, ED) so ED sits on the lane axis inside the kernel.
    A_t = jnp.tile(jnp.arange(1, d_state + 1, dtype=jnp.float32)[:, None], (1, ED))
    for _ in range(n_layers):
        params["layers"].append({
            "rms_w": jnp.ones((1, hidden), jnp.float32),
            "in_proj_x_w": nrm((hidden, ED)).astype(bf),
            "in_proj_z_w": nrm((hidden, ED)).astype(bf),
            "conv_w": nrm((d_conv, ED)),
            "conv_b": nrm((ED,)).reshape(1, ED),
            "x_proj_dt_w": nrm((ED, dt_rank)).astype(bf),
            "x_proj_B_w": nrm((ED, d_state)).astype(bf),
            "x_proj_C_w": nrm((ED, d_state)).astype(bf),
            "dt_proj_w": nrm((dt_rank, ED)).astype(bf),
            "dt_proj_b": nrm((ED,)).reshape(1, ED),
            "A_log_t": jnp.log(A_t),
            "D": jnp.ones((1, ED), jnp.float32),
            "out_proj_w": nrm((ED, hidden)).astype(bf),
        })
    return params


@functools.partial(jax.jit, static_argnames=("hidden", "out_dim"))
def net_forward(params, x, *, hidden, out_dim):
    B, L, in_dim = x.shape
    h = linear(x.reshape(B * L, in_dim),
               params["lin1_wp"], params["lin1_bp"], hidden).reshape(B, L, hidden)
    for lp in params["layers"]:
        h = mamba_block(h, lp)
    out = linear(h.reshape(B * L, hidden),
                 params["lin2_wp"], params["lin2_bp"], out_dim, activation="tanh")
    return out.reshape(-1)                                     # matches torch .flatten()


if __name__ == "__main__":
    in_dim, hidden, out_dim, n_layers = 4, 32, 4, 2
    B, L = 2, 8
    key = jax.random.PRNGKey(0)
    pkey, xkey = jax.random.split(key)
    params = init_params(pkey, in_dim, hidden, out_dim, n_layers)
    x = jax.random.normal(xkey, (B, L, in_dim), dtype=jnp.float32)

    out = net_forward(params, x, hidden=hidden, out_dim=out_dim)
    jax.block_until_ready(out)
    assert out.shape == (B * L * out_dim,), out.shape
    assert bool(jnp.all(jnp.isfinite(out)))
    print("KERNEL_OK")
</pallas_src>

<mosaic_0001>
module attributes {stable_mosaic.version = 11 : i64} {
  func.func @_linear_kernel(%arg0: i32, %arg1: i32, %arg2: i32, %arg3: memref<16x128xbf16, #tpu.memory_space<vmem>>, %arg4: memref<128x128xbf16, #tpu.memory_space<vmem>>, %arg5: memref<1x128xf32, #tpu.memory_space<vmem>>, %arg6: memref<16x128xf32, #tpu.memory_space<vmem>>, %arg7: memref<16x128xf32, #tpu.memory_space<vmem>>) attributes {dimension_semantics = [#tpu.dimension_semantics<parallel>, #tpu.dimension_semantics<parallel>, #tpu.dimension_semantics<arbitrary>], iteration_bounds = array<i64: 1, 1, 1>, scalar_prefetch = 0 : i64, scratch_operands = 1 : i64, tpu.core_type = #tpu.core_type<tc>, window_params = [{transform_indices = @transform_0, window_bounds = array<i64: 16, 128>}, {transform_indices = @transform_1, window_bounds = array<i64: 128, 128>}, {transform_indices = @transform_2, window_bounds = array<i64: 1, 128>}, {transform_indices = @transform_3, window_bounds = array<i64: 16, 128>}]} {
    %c0_i32 = arith.constant 0 : i32
    %0 = arith.cmpi eq, %arg2, %c0_i32 : i32
    %1 = arith.extui %0 : i1 to i32
    %c0_i32_0 = arith.constant 0 : i32
    %2 = arith.cmpi ne, %1, %c0_i32_0 : i32
    scf.if %2 {
      %cst_10 = arith.constant 0.000000e+00 : f32
      %12 = vector.broadcast %cst_10 : f32 to vector<16x128xf32>
      %c0_11 = arith.constant 0 : index
      %c0_12 = arith.constant 0 : index
      %13 = vector.load %arg7[%c0_11, %c0_12] : memref<16x128xf32, #tpu.memory_space<vmem>>, vector<16x128xf32>
      tpu.vector_store %arg7[%c0_11, %c0_12], %12 {strides = array<i32>} : memref<16x128xf32, #tpu.memory_space<vmem>>, vector<16x128xf32>,
    } else {
    }
    %c0 = arith.constant 0 : index
    %c0_1 = arith.constant 0 : index
    %3 = vector.load %arg7[%c0, %c0_1] : memref<16x128xf32, #tpu.memory_space<vmem>>, vector<16x128xf32>
    %c0_2 = arith.constant 0 : index
    %c0_3 = arith.constant 0 : index
    %4 = vector.load %arg3[%c0_2, %c0_3] : memref<16x128xbf16, #tpu.memory_space<vmem>>, vector<16x128xbf16>
    %c0_4 = arith.constant 0 : index
    %c0_5 = arith.constant 0 : index
    %5 = vector.load %arg4[%c0_4, %c0_5] : memref<128x128xbf16, #tpu.memory_space<vmem>>, vector<128x128xbf16>
    %cst = arith.constant dense<0.000000e+00> : vector<16x128xf32>
    %6 = tpu.matmul %4, %5, %cst {dimension_numbers = #tpu.dot_dimension_numbers<[1], [0], [0], [1], [0, 0, 1, 1], [], []>} : vector<16x128xbf16>, vector<128x128xbf16>, vector<16x128xf32> -> vector<16x128xf32>
    %7 = arith.addf %3, %6 : vector<16x128xf32>
    %c0_6 = arith.constant 0 : index
    %c0_7 = arith.constant 0 : index
    %8 = vector.load %arg7[%c0_6, %c0_7] : memref<16x128xf32, #tpu.memory_space<vmem>>, vector<16x128xf32>
    tpu.vector_store %arg7[%c0_6, %c0_7], %7 {strides = array<i32>} : memref<16x128xf32, #tpu.memory_space<vmem>>, vector<16x128xf32>,
    %c0_i32_8 = arith.constant 0 : i32
    %9 = arith.cmpi eq, %arg2, %c0_i32_8 : i32
    %10 = arith.extui %9 : i1 to i32
    %c0_i32_9 = arith.constant 0 : i32
    %11 = arith.cmpi ne, %10, %c0_i32_9 : i32
    scf.if %11 {
      %c0_10 = arith.constant 0 : index
      %c0_11 = arith.constant 0 : index
      %12 = vector.load %arg7[%c0_10, %c0_11] : memref<16x128xf32, #tpu.memory_space<vmem>>, vector<16x128xf32>
      %c0_12 = arith.constant 0 : index
      %c0_13 = arith.constant 0 : index
      %13 = vector.load %arg5[%c0_12, %c0_13] : memref<1x128xf32, #tpu.memory_space<vmem>>, vector<1x128xf32>
      %14 = vector.broadcast %13 : vector<1x128xf32> to vector<16x128xf32>
      %15 = arith.addf %12, %14 : vector<16x128xf32>
      %c0_14 = arith.constant 0 : index
      %c0_15 = arith.constant 0 : index
      %16 = vector.load %arg6[%c0_14, %c0_15] : memref<16x128xf32, #tpu.memory_space<vmem>>, vector<16x128xf32>
      tpu.vector_store %arg6[%c0_14, %c0_15], %15 {strides = array<i32>} : memref<16x128xf32, #tpu.memory_space<vmem>>, vector<16x128xf32>,
    } else {
    }
    return
  }
  func.func @transform_0(%arg0: i32, %arg1: i32, %arg2: i32) -> (i32, i32) {
    %c0_i32 = arith.constant 0 : i32
    return %arg0, %arg2 : i32, i32
  }
  func.func @transform_1(%arg0: i32, %arg1: i32, %arg2: i32) -> (i32, i32) {
    %c0_i32 = arith.constant 0 : i32
    return %arg2, %arg1 : i32, i32
  }
  func.func @transform_2(%arg0: i32, %arg1: i32, %arg2: i32) -> (i32, i32) {
    %c0_i32 = arith.constant 0 : i32
    %c0_i32_0 = arith.constant 0 : i32
    return %c0_i32, %arg1 : i32, i32
  }
  func.func @transform_3(%arg0: i32, %arg1: i32, %arg2: i32) -> (i32, i32) {
    %c0_i32 = arith.constant 0 : i32
    return %arg0, %arg1 : i32, i32
  }
}

module attributes {stable_mosaic.version = 11 : i64} {
  func.func @_linear_kernel(%arg0: i32, %arg1: i32, %arg2: i32, %arg3: memref<16x128xbf16, #tpu.memory_space<vmem>>, %arg4: memref<128x128xbf16, #tpu.memory_space<vmem>>, %arg5: memref<1x128xf32, #tpu.memory_space<vmem>>, %arg6: memref<16x128xf32, #tpu.memory_space<vmem>>, %arg7: memref<16x128xf32, #tpu.memory_space<vmem>>) attributes {dimension_semantics = [#tpu.dimension_semantics<parallel>, #tpu.dimension_semantics<parallel>, #tpu.dimension_semantics<arbitrary>], iteration_bounds = array<i64: 1, 1, 1>, scalar_prefetch = 0 : i64, scratch_operands = 1 : i64, tpu.core_type = #tpu.core_type<tc>, window_params = [{transform_indices = @transform_0, window_bounds = array<i64: 16, 128>}, {transform_indices = @transform_1, window_bounds = array<i64: 128, 128>}, {transform_indices = @transform_2, window_bounds = array<i64: 1, 128>}, {transform_indices = @transform_3, window_bounds = array<i64: 16, 128>}]} {
    %c0_i32 = arith.constant 0 : i32
    %0 = arith.cmpi eq, %arg2, %c0_i32 : i32
    %1 = arith.extui %0 : i1 to i32
    %c0_i32_0 = arith.constant 0 : i32
    %2 = arith.cmpi ne, %1, %c0_i32_0 : i32
    scf.if %2 {
      %cst_10 = arith.constant 0.000000e+00 : f32
      %12 = vector.broadcast %cst_10 : f32 to vector<16x128xf32>
      %c0_11 = arith.constant 0 : index
      %c0_12 = arith.constant 0 : index
      %13 = vector.load %arg7[%c0_11, %c0_12] : memref<16x128xf32, #tpu.memory_space<vmem>>, vector<16x128xf32>
      tpu.vector_store %arg7[%c0_11, %c0_12], %12 {strides = array<i32>} : memref<16x128xf32, #tpu.memory_space<vmem>>, vector<16x128xf32>,
    } else {
    }
    %c0 = arith.constant 0 : index
    %c0_1 = arith.constant 0 : index
    %3 = vector.load %arg7[%c0, %c0_1] : memref<16x128xf32, #tpu.memory_space<vmem>>, vector<16x128xf32>
    %c0_2 = arith.constant 0 : index
    %c0_3 = arith.constant 0 : index
    %4 = vector.load %arg3[%c0_2, %c0_3] : memref<16x128xbf16, #tpu.memory_space<vmem>>, vector<16x128xbf16>
    %c0_4 = arith.constant 0 : index
    %c0_5 = arith.constant 0 : index
    %5 = vector.load %arg4[%c0_4, %c0_5] : memref<128x128xbf16, #tpu.memory_space<vmem>>, vector<128x128xbf16>
    %cst = arith.constant dense<0.000000e+00> : vector<16x128xf32>
    %6 = tpu.matmul %4, %5, %cst {dimension_numbers = #tpu.dot_dimension_numbers<[1], [0], [0], [1], [0, 0, 1, 1], [], []>} : vector<16x128xbf16>, vector<128x128xbf16>, vector<16x128xf32> -> vector<16x128xf32>
    %7 = arith.addf %3, %6 : vector<16x128xf32>
    %c0_6 = arith.constant 0 : index
    %c0_7 = arith.constant 0 : index
    %8 = vector.load %arg7[%c0_6, %c0_7] : memref<16x128xf32, #tpu.memory_space<vmem>>, vector<16x128xf32>
    tpu.vector_store %arg7[%c0_6, %c0_7], %7 {strides = array<i32>} : memref<16x128xf32, #tpu.memory_space<vmem>>, vector<16x128xf32>,
    %c0_i32_8 = arith.constant 0 : i32
    %9 = arith.cmpi eq, %arg2, %c0_i32_8 : i32
    %10 = arith.extui %9 : i1 to i32
    %c0_i32_9 = arith.constant 0 : i32
    %11 = arith.cmpi ne, %10, %c0_i32_9 : i32
    scf.if %11 {
      %c0_10 = arith.constant 0 : index
      %c0_11 = arith.constant 0 : index
      %12 = vector.load %arg7[%c0_10, %c0_11] : memref<16x128xf32, #tpu.memory_space<vmem>>, vector<16x128xf32>
      %c0_12 = arith.constant 0 : index
      %c0_13 = arith.constant 0 : index
      %13 = vector.load %arg5[%c0_12, %c0_13] : memref<1x128xf32, #tpu.memory_space<vmem>>, vector<1x128xf32>
      %14 = vector.broadcast %13 : vector<1x128xf32> to vector<16x128xf32>
      %15 = arith.addf %12, %14 : vector<16x128xf32>
      %16 = math.tanh %15 : vector<16x128xf32>
      %c0_14 = arith.constant 0 : index
      %c0_15 = arith.constant 0 : index
      %17 = vector.load %arg6[%c0_14, %c0_15] : memref<16x128xf32, #tpu.memory_space<vmem>>, vector<16x128xf32>
      tpu.vector_store %arg6[%c0_14, %c0_15], %16 {strides = array<i32>} : memref<16x128xf32, #tpu.memory_space<vmem>>, vector<16x128xf32>,
    } else {
    }
    return
  }
  func.func @transform_0(%arg0: i32, %arg1: i32, %arg2: i32) -> (i32, i32) {
    %c0_i32 = arith.constant 0 : i32
    return %arg0, %arg2 : i32, i32
  }
  func.func @transform_1(%arg0: i32, %arg1: i32, %arg2: i32) -> (i32, i32) {
    %c0_i32 = arith.constant 0 : i32
    return %arg2, %arg1 : i32, i32
  }
  func.func @transform_2(%arg0: i32, %arg1: i32, %arg2: i32) -> (i32, i32) {
    %c0_i32 = arith.constant 0 : i32
    %c0_i32_0 = arith.constant 0 : i32
    return %c0_i32, %arg1 : i32, i32
  }
  func.func @transform_3(%arg0: i32, %arg1: i32, %arg2: i32) -> (i32, i32) {
    %c0_i32 = arith.constant 0 : i32
    return %arg0, %arg1 : i32, i32
  }
}

module attributes {stable_mosaic.version = 11 : i64} {
  func.func @_mamba_block_kernel(%arg0: i32, %arg1: memref<1x8x32xf32, #tpu.memory_space<vmem>>, %arg2: memref<1x32xf32, #tpu.memory_space<vmem>>, %arg3: memref<32x64xbf16, #tpu.memory_space<vmem>>, %arg4: memref<32x64xbf16, #tpu.memory_space<vmem>>, %arg5: memref<4x64xf32, #tpu.memory_space<vmem>>, %arg6: memref<1x64xf32, #tpu.memory_space<vmem>>, %arg7: memref<64x2xbf16, #tpu.memory_space<vmem>>, %arg8: memref<64x16xbf16, #tpu.memory_space<vmem>>, %arg9: memref<64x16xbf16, #tpu.memory_space<vmem>>, %arg10: memref<2x64xbf16, #tpu.memory_space<vmem>>, %arg11: memref<1x64xf32, #tpu.memory_space<vmem>>, %arg12: memref<16x64xf32, #tpu.memory_space<vmem>>, %arg13: memref<1x64xf32, #tpu.memory_space<vmem>>, %arg14: memref<64x32xbf16, #tpu.memory_space<vmem>>, %arg15: memref<1x8x32xf32, #tpu.memory_space<vmem>>, %arg16: memref<8x64xf32, #tpu.memory_space<vmem>>, %arg17: memref<8x64xf32, #tpu.memory_space<vmem>>, %arg18: memref<8x16xf32, #tpu.memory_space<vmem>>, %arg19: memref<8x16xf32, #tpu.memory_space<vmem>>, %arg20: memref<8x16x64xf32, #tpu.memory_space<vmem>>, %arg21: memref<8x16x64xf32, #tpu.memory_space<vmem>>, %arg22: memref<8x16x64xf32, #tpu.memory_space<vmem>>, %arg23: memref<8x64xf32, #tpu.memory_space<vmem>>) attributes {dimension_semantics = [#tpu.dimension_semantics<parallel>], iteration_bounds = array<i64: 2>, scalar_prefetch = 0 : i64, scratch_operands = 8 : i64, tpu.core_type = #tpu.core_type<tc>, window_params = [{transform_indices = @transform_0, window_bounds = array<i64: 1, 8, 32>}, {pipeline_mode = #tpu.pipeline_mode<synchronous>, transform_indices = @transform_1, window_bounds = array<i64: 1, 32>}, {pipeline_mode = #tpu.pipeline_mode<synchronous>, transform_indices = @transform_2, window_bounds = array<i64: 32, 64>}, {pipeline_mode = #tpu.pipeline_mode<synchronous>, transform_indices = @transform_3, window_bounds = array<i64: 32, 64>}, {pipeline_mode = #tpu.pipeline_mode<synchronous>, transform_indices = @transform_4, window_bounds = array<i64: 4, 64>}, {pipeline_mode = #tpu.pipeline_mode<synchronous>, transform_indices = @transform_5, window_bounds = array<i64: 1, 64>}, {pipeline_mode = #tpu.pipeline_mode<synchronous>, transform_indices = @transform_6, window_bounds = array<i64: 64, 2>}, {pipeline_mode = #tpu.pipeline_mode<synchronous>, transform_indices = @transform_7, window_bounds = array<i64: 64, 16>}, {pipeline_mode = #tpu.pipeline_mode<synchronous>, transform_indices = @transform_8, window_bounds = array<i64: 64, 16>}, {pipeline_mode = #tpu.pipeline_mode<synchronous>, transform_indices = @transform_9, window_bounds = array<i64: 2, 64>}, {pipeline_mode = #tpu.pipeline_mode<synchronous>, transform_indices = @transform_10, window_bounds = array<i64: 1, 64>}, {pipeline_mode = #tpu.pipeline_mode<synchronous>, transform_indices = @transform_11, window_bounds = array<i64: 16, 64>}, {pipeline_mode = #tpu.pipeline_mode<synchronous>, transform_indices = @transform_12, window_bounds = array<i64: 1, 64>}, {pipeline_mode = #tpu.pipeline_mode<synchronous>, transform_indices = @transform_13, window_bounds = array<i64: 64, 32>}, {transform_indices = @transform_14, window_bounds = array<i64: 1, 8, 32>}]} {
    %c0 = arith.constant 0 : index
    %c0_0 = arith.constant 0 : index
    %c0_1 = arith.constant 0 : index
    %0 = vector.load %arg1[%c0, %c0_0, %c0_1] : memref<1x8x32xf32, #tpu.memory_space<vmem>>, vector<1x8x32xf32>
    %1 = vector.shape_cast %0 : vector<1x8x32xf32> to vector<8x32xf32>
    %2 = arith.mulf %1, %1 : vector<8x32xf32>
    %cst = arith.constant dense<0.000000e+00> : vector<8xf32>
    %3 = vector.multi_reduction <add>, %2, %cst [1] : vector<8x32xf32> to vector<8xf32>
    %4 = vector.shape_cast %3 : vector<8xf32> to vector<8x1xf32>
    %cst_2 = arith.constant 3.200000e+01 : f32
    %5 = vector.broadcast %cst_2 : f32 to vector<8x1xf32>
    %6 = arith.divf %4, %5 : vector<8x1xf32>
    %cst_3 = arith.constant 9.99999974E-6 : f32
    %7 = vector.broadcast %cst_3 : f32 to vector<8x1xf32>
    %8 = arith.addf %6, %7 : vector<8x1xf32>
    %9 = math.rsqrt %8 : vector<8x1xf32>
    %10 = vector.broadcast %9 : vector<8x1xf32> to vector<8x32xf32>
    %11 = arith.mulf %1, %10 : vector<8x32xf32>
    %c0_4 = arith.constant 0 : index
    %c0_5 = arith.constant 0 : index
    %12 = vector.load %arg2[%c0_4, %c0_5] : memref<1x32xf32, #tpu.memory_space<vmem>>, vector<1x32xf32>
    %13 = vector.broadcast %12 : vector<1x32xf32> to vector<8x32xf32>
    %14 = arith.mulf %11, %13 : vector<8x32xf32>
    %15 = arith.truncf %14 : vector<8x32xf32> to vector<8x32xbf16>
    %c0_6 = arith.constant 0 : index
    %c0_7 = arith.constant 0 : index
    %16 = vector.load %arg3[%c0_6, %c0_7] : memref<32x64xbf16, #tpu.memory_space<vmem>>, vector<32x64xbf16>
    %cst_8 = arith.constant dense<0.000000e+00> : vector<8x64xf32>
    %17 = tpu.matmul %15, %16, %cst_8 {dimension_numbers = #tpu.dot_dimension_numbers<[1], [0], [0], [1], [0, 0, 1, 1], [], []>} : vector<8x32xbf16>, vector<32x64xbf16>, vector<8x64xf32> -> vector<8x64xf32>
    %c0_9 = arith.constant 0 : index
    %c0_10 = arith.constant 0 : index
    %18 = vector.load %arg4[%c0_9, %c0_10] : memref<32x64xbf16, #tpu.memory_space<vmem>>, vector<32x64xbf16>
    %cst_11 = arith.constant dense<0.000000e+00> : vector<8x64xf32>
    %19 = tpu.matmul %15, %18, %cst_11 {dimension_numbers = #tpu.dot_dimension_numbers<[1], [0], [0], [1], [0, 0, 1, 1], [], []>} : vector<8x32xbf16>, vector<32x64xbf16>, vector<8x64xf32> -> vector<8x64xf32>
    %c0_12 = arith.constant 0 : index
    %c0_13 = arith.constant 0 : index
    %20 = vector.load %arg5[%c0_12, %c0_13] : memref<4x64xf32, #tpu.memory_space<vmem>>, vector<4x64xf32>
    %21 = tpu.iota {dimensions = array<i32: 0>} : vector<8x1xi32>
    %22 = vector.extract_strided_slice %20 {offsets = [3, 0], sizes = [1, 64], strides = [1, 1]} : vector<4x64xf32> to vector<1x64xf32>
    %23 = vector.broadcast %22 : vector<1x64xf32> to vector<8x64xf32>
    %24 = arith.mulf %17, %23 : vector<8x64xf32>
    %c3_i32 = arith.constant 3 : i32
    %25 = tpu.dynamic_rotate %17 by %c3_i32 dim 0 : vector<8x64xf32>, i32 -> vector<8x64xf32>
    %c3_i32_14 = arith.constant 3 : i32
    %26 = vector.broadcast %c3_i32_14 : i32 to vector<8x1xi32>
    %27 = arith.cmpi sge, %21, %26 : vector<8x1xi32>
    %cst_15 = arith.constant 0.000000e+00 : f32
    %28 = vector.shape_cast %27 : vector<8x1xi1> to vector<8x1xi1>
    %29 = vector.broadcast %28 : vector<8x1xi1> to vector<8x64xi1>
    %30 = vector.broadcast %cst_15 : f32 to vector<8x64xf32>
    %31 = arith.select %29, %25, %30 : vector<8x64xi1>, vector<8x64xf32>
    %32 = vector.extract_strided_slice %20 {offsets = [0, 0], sizes = [1, 64], strides = [1, 1]} : vector<4x64xf32> to vector<1x64xf32>
    %33 = vector.broadcast %32 : vector<1x64xf32> to vector<8x64xf32>
    %34 = arith.mulf %31, %33 : vector<8x64xf32>
    %35 = arith.addf %24, %34 : vector<8x64xf32>
    %c2_i32 = arith.constant 2 : i32
    %36 = tpu.dynamic_rotate %17 by %c2_i32 dim 0 : vector<8x64xf32>, i32 -> vector<8x64xf32>
    %c2_i32_16 = arith.constant 2 : i32
    %37 = vector.broadcast %c2_i32_16 : i32 to vector<8x1xi32>
    %38 = arith.cmpi sge, %21, %37 : vector<8x1xi32>
    %cst_17 = arith.constant 0.000000e+00 : f32
    %39 = vector.shape_cast %38 : vector<8x1xi1> to vector<8x1xi1>
    %40 = vector.broadcast %39 : vector<8x1xi1> to vector<8x64xi1>
    %41 = vector.broadcast %cst_17 : f32 to vector<8x64xf32>
    %42 = arith.select %40, %36, %41 : vector<8x64xi1>, vector<8x64xf32>
    %43 = vector.extract_strided_slice %20 {offsets = [1, 0], sizes = [1, 64], strides = [1, 1]} : vector<4x64xf32> to vector<1x64xf32>
    %44 = vector.broadcast %43 : vector<1x64xf32> to vector<8x64xf32>
    %45 = arith.mulf %42, %44 : vector<8x64xf32>
    %46 = arith.addf %35, %45 : vector<8x64xf32>
    %c1_i32 = arith.constant 1 : i32
    %47 = tpu.dynamic_rotate %17 by %c1_i32 dim 0 : vector<8x64xf32>, i32 -> vector<8x64xf32>
    %c1_i32_18 = arith.constant 1 : i32
    %48 = vector.broadcast %c1_i32_18 : i32 to vector<8x1xi32>
    %49 = arith.cmpi sge, %21, %48 : vector<8x1xi32>
    %cst_19 = arith.constant 0.000000e+00 : f32
    %50 = vector.shape_cast %49 : vector<8x1xi1> to vector<8x1xi1>
    %51 = vector.broadcast %50 : vector<8x1xi1> to vector<8x64xi1>
    %52 = vector.broadcast %cst_19 : f32 to vector<8x64xf32>
    %53 = arith.select %51, %47, %52 : vector<8x64xi1>, vector<8x64xf32>
    %54 = vector.extract_strided_slice %20 {offsets = [2, 0], sizes = [1, 64], strides = [1, 1]} : vector<4x64xf32> to vector<1x64xf32>
    %55 = vector.broadcast %54 : vector<1x64xf32> to vector<8x64xf32>
    %56 = arith.mulf %53, %55 : vector<8x64xf32>
    %57 = arith.addf %46, %56 : vector<8x64xf32>
    %c0_20 = arith.constant 0 : index
    %c0_21 = arith.constant 0 : index
    %58 = vector.load %arg6[%c0_20, %c0_21] : memref<1x64xf32, #tpu.memory_space<vmem>>, vector<1x64xf32>
    %59 = vector.broadcast %58 : vector<1x64xf32> to vector<8x64xf32>
    %60 = arith.addf %57, %59 : vector<8x64xf32>
    %61 = arith.negf %60 : vector<8x64xf32>
    %62 = math.exp %61 : vector<8x64xf32>
    %cst_22 = arith.constant 1.000000e+00 : f32
    %63 = vector.broadcast %cst_22 : f32 to vector<8x64xf32>
    %64 = arith.addf %63, %62 : vector<8x64xf32>
    %65 = arith.divf %63, %64 : vector<8x64xf32>
    %66 = arith.mulf %60, %65 : vector<8x64xf32>
    %67 = arith.truncf %66 : vector<8x64xf32> to vector<8x64xbf16>
    %c0_23 = arith.constant 0 : index
    %c0_24 = arith.constant 0 : index
    %68 = vector.load %arg7[%c0_23, %c0_24] : memref<64x2xbf16, #tpu.memory_space<vmem>>, vector<64x2xbf16>
    %cst_25 = arith.constant dense<0.000000e+00> : vector<8x2xf32>
    %69 = tpu.matmul %67, %68, %cst_25 {dimension_numbers = #tpu.dot_dimension_numbers<[1], [0], [0], [1], [0, 0, 1, 1], [], []>} : vector<8x64xbf16>, vector<64x2xbf16>, vector<8x2xf32> -> vector<8x2xf32>
    %c0_26 = arith.constant 0 : index
    %c0_27 = arith.constant 0 : index
    %70 = vector.load %arg8[%c0_26, %c0_27] : memref<64x16xbf16, #tpu.memory_space<vmem>>, vector<64x16xbf16>
    %cst_28 = arith.constant dense<0.000000e+00> : vector<8x16xf32>
    %71 = tpu.matmul %67, %70, %cst_28 {dimension_numbers = #tpu.dot_dimension_numbers<[1], [0], [0], [1], [0, 0, 1, 1], [], []>} : vector<8x64xbf16>, vector<64x16xbf16>, vector<8x16xf32> -> vector<8x16xf32>
    %c0_29 = arith.constant 0 : index
    %c0_30 = arith.constant 0 : index
    %72 = vector.load %arg18[%c0_29, %c0_30] : memref<8x16xf32, #tpu.memory_space<vmem>>, vector<8x16xf32>
    tpu.vector_store %arg18[%c0_29, %c0_30], %71 {strides = array<i32>} : memref<8x16xf32, #tpu.memory_space<vmem>>, vector<8x16xf32>,
    %c0_31 = arith.constant 0 : index
    %c0_32 = arith.constant 0 : index
    %73 = vector.load %arg9[%c0_31, %c0_32] : memref<64x16xbf16, #tpu.memory_space<vmem>>, vector<64x16xbf16>
    %cst_33 = arith.constant dense<0.000000e+00> : vector<8x16xf32>
    %74 = tpu.matmul %67, %73, %cst_33 {dimension_numbers = #tpu.dot_dimension_numbers<[1], [0], [0], [1], [0, 0, 1, 1], [], []>} : vector<8x64xbf16>, vector<64x16xbf16>, vector<8x16xf32> -> vector<8x16xf32>
    %c0_34 = arith.constant 0 : index
    %c0_35 = arith.constant 0 : index
    %75 = vector.load %arg19[%c0_34, %c0_35] : memref<8x16xf32, #tpu.memory_space<vmem>>, vector<8x16xf32>
    tpu.vector_store %arg19[%c0_34, %c0_35], %74 {strides = array<i32>} : memref<8x16xf32, #tpu.memory_space<vmem>>, vector<8x16xf32>,
    %76 = arith.truncf %69 : vector<8x2xf32> to vector<8x2xbf16>
    %c0_36 = arith.constant 0 : index
    %c0_37 = arith.constant 0 : index
    %77 = vector.load %arg10[%c0_36, %c0_37] : memref<2x64xbf16, #tpu.memory_space<vmem>>, vector<2x64xbf16>
    %cst_38 = arith.constant dense<0.000000e+00> : vector<8x64xf32>
    %78 = tpu.matmul %76, %77, %cst_38 {dimension_numbers = #tpu.dot_dimension_numbers<[1], [0], [0], [1], [0, 0, 1, 1], [], []>} : vector<8x2xbf16>, vector<2x64xbf16>, vector<8x64xf32> -> vector<8x64xf32>
    %c0_39 = arith.constant 0 : index
    %c0_40 = arith.constant 0 : index
    %79 = vector.load %arg11[%c0_39, %c0_40] : memref<1x64xf32, #tpu.memory_space<vmem>>, vector<1x64xf32>
    %80 = vector.broadcast %79 : vector<1x64xf32> to vector<8x64xf32>
    %81 = arith.addf %78, %80 : vector<8x64xf32>
    %cst_41 = arith.constant 2.000000e+01 : f32
    %82 = vector.broadcast %cst_41 : f32 to vector<8x64xf32>
    %83 = arith.minimumf %81, %82 : vector<8x64xf32>
    %cst_42 = arith.constant 2.000000e+01 : f32
    %84 = vector.broadcast %cst_42 : f32 to vector<8x64xf32>
    %85 = arith.cmpf ogt, %81, %84 : vector<8x64xf32>
    %86 = math.exp %83 : vector<8x64xf32>
    %87 = math.log1p %86 : vector<8x64xf32>
    %88 = arith.select %85, %81, %87 : vector<8x64xi1>, vector<8x64xf32>
    %c0_43 = arith.constant 0 : index
    %c0_44 = arith.constant 0 : index
    %89 = vector.load %arg16[%c0_43, %c0_44] : memref<8x64xf32, #tpu.memory_space<vmem>>, vector<8x64xf32>
    tpu.vector_store %arg16[%c0_43, %c0_44], %88 {strides = array<i32>} : memref<8x64xf32, #tpu.memory_space<vmem>>, vector<8x64xf32>,
    %90 = arith.mulf %88, %66 : vector<8x64xf32>
    %c0_45 = arith.constant 0 : index
    %c0_46 = arith.constant 0 : index
    %91 = vector.load %arg17[%c0_45, %c0_46] : memref<8x64xf32, #tpu.memory_space<vmem>>, vector<8x64xf32>
    tpu.vector_store %arg17[%c0_45, %c0_46], %90 {strides = array<i32>} : memref<8x64xf32, #tpu.memory_space<vmem>>, vector<8x64xf32>,
    %c0_47 = arith.constant 0 : index
    %c0_48 = arith.constant 0 : index
    %92 = vector.load %arg12[%c0_47, %c0_48] : memref<16x64xf32, #tpu.memory_space<vmem>>, vector<16x64xf32>
    %93 = math.exp %92 : vector<16x64xf32>
    %cst_49 = arith.constant 0.000000e+00 : f32
    %94 = vector.broadcast %cst_49 : f32 to vector<16x64xf32>
    %95 = arith.subf %94, %93 : vector<16x64xf32>
    %cst_50 = arith.constant 0.000000e+00 : f32
    %96 = vector.broadcast %cst_50 : f32 to vector<16x64xf32>
    %c0_i32 = arith.constant 0 : i32
    %c8_i32 = arith.constant 8 : i32
    %97 = arith.muli %c0_i32, %c8_i32 : i32
    %98 = tpu.assume_multiple %97, 8 : i32
    %99 = arith.index_cast %98 : i32 to index
    %c0_51 = arith.constant 0 : index
    %100 = vector.load %arg16[%99, %c0_51] : memref<8x64xf32, #tpu.memory_space<vmem>>, vector<8x64xf32>
    %101 = arith.index_cast %98 : i32 to index
    %c0_52 = arith.constant 0 : index
    %102 = vector.load %arg17[%101, %c0_52] : memref<8x64xf32, #tpu.memory_space<vmem>>, vector<8x64xf32>
    %103 = arith.index_cast %98 : i32 to index
    %c0_53 = arith.constant 0 : index
    %104 = vector.load %arg18[%103, %c0_53] : memref<8x16xf32, #tpu.memory_space<vmem>>, vector<8x16xf32>
    %105 = arith.index_cast %98 : i32 to index
    %c0_54 = arith.constant 0 : index
    %106 = vector.load %arg19[%105, %c0_54] : memref<8x16xf32, #tpu.memory_space<vmem>>, vector<8x16xf32>
    %107 = vector.shape_cast %100 : vector<8x64xf32> to vector<8x1x64xf32>
    %108 = vector.shape_cast %95 : vector<16x64xf32> to vector<1x16x64xf32>
    %109 = vector.broadcast %107 : vector<8x1x64xf32> to vector<8x16x64xf32>
    %110 = vector.broadcast %108 : vector<1x16x64xf32> to vector<8x16x64xf32>
    %111 = arith.mulf %109, %110 : vector<8x16x64xf32>
    %112 = math.exp %111 : vector<8x16x64xf32>
    %c0_55 = arith.constant 0 : index
    %c0_56 = arith.constant 0 : index
    %c0_57 = arith.constant 0 : index
    %113 = vector.load %arg20[%c0_55, %c0_56, %c0_57] : memref<8x16x64xf32, #tpu.memory_space<vmem>>, vector<8x16x64xf32>
    tpu.vector_store %arg20[%c0_55, %c0_56, %c0_57], %112 {strides = array<i32>} : memref<8x16x64xf32, #tpu.memory_space<vmem>>, vector<8x16x64xf32>,
    %114 = vector.shape_cast %102 : vector<8x64xf32> to vector<8x1x64xf32>
    %115 = vector.shape_cast %104 : vector<8x16xf32> to vector<8x16x1xf32>
    %116 = vector.broadcast %114 : vector<8x1x64xf32> to vector<8x16x64xf32>
    %117 = vector.broadcast %115 : vector<8x16x1xf32> to vector<8x16x64xf32>
    %118 = arith.mulf %116, %117 : vector<8x16x64xf32>
    %c0_58 = arith.constant 0 : index
    %c0_59 = arith.constant 0 : index
    %c0_60 = arith.constant 0 : index
    %119 = vector.load %arg21[%c0_58, %c0_59, %c0_60] : memref<8x16x64xf32, #tpu.memory_space<vmem>>, vector<8x16x64xf32>
    tpu.vector_store %arg21[%c0_58, %c0_59, %c0_60], %118 {strides = array<i32>} : memref<8x16x64xf32, #tpu.memory_space<vmem>>, vector<8x16x64xf32>,
    %c0_i32_61 = arith.constant 0 : i32
    %c8_i32_62 = arith.constant 8 : i32
    %120 = arith.addi %c0_i32_61, %c8_i32_62 : i32
    %c1_i32_63 = arith.constant 1 : i32
    %121 = scf.for %arg24 = %c0_i32_61 to %120 step %c1_i32_63 iter_args(%arg25 = %96) -> (vector<16x64xf32>)  : i32 {
      %148 = arith.index_cast %arg24 : i32 to index
      %c0_82 = arith.constant 0 : index
      %c0_83 = arith.constant 0 : index
      %149 = vector.load %arg20[%148, %c0_82, %c0_83] : memref<8x16x64xf32, #tpu.memory_space<vmem>>, vector<1x16x64xf32>
      %150 = vector.shape_cast %149 : vector<1x16x64xf32> to vector<16x64xf32>
      %151 = arith.mulf %150, %arg25 : vector<16x64xf32>
      %152 = arith.index_cast %arg24 : i32 to index
      %c0_84 = arith.constant 0 : index
      %c0_85 = arith.constant 0 : index
      %153 = vector.load %arg21[%152, %c0_84, %c0_85] : memref<8x16x64xf32, #tpu.memory_space<vmem>>, vector<1x16x64xf32>
      %154 = vector.shape_cast %153 : vector<1x16x64xf32> to vector<16x64xf32>
      %155 = arith.addf %151, %154 : vector<16x64xf32>
      %156 = arith.index_cast %arg24 : i32 to index
      %c0_86 = arith.constant 0 : index
      %c0_87 = arith.constant 0 : index
      %157 = vector.load %arg22[%156, %c0_86, %c0_87] : memref<8x16x64xf32, #tpu.memory_space<vmem>>, vector<1x16x64xf32>
      %158 = vector.shape_cast %157 : vector<1x16x64xf32> to vector<16x64xf32>
      %159 = vector.shape_cast %155 : vector<16x64xf32> to vector<1x16x64xf32>
      tpu.vector_store %arg22[%156, %c0_86, %c0_87], %159 {strides = array<i32>} : memref<8x16x64xf32, #tpu.memory_space<vmem>>, vector<1x16x64xf32>,
      scf.yield %155 : vector<16x64xf32>
    }
    %c8_i32_64 = arith.constant 8 : i32
    %c0_65 = arith.constant 0 : index
    %c0_66 = arith.constant 0 : index
    %c0_67 = arith.constant 0 : index
    %122 = vector.load %arg22[%c0_65, %c0_66, %c0_67] : memref<8x16x64xf32, #tpu.memory_space<vmem>>, vector<8x16x64xf32>
    %123 = vector.shape_cast %106 : vector<8x16xf32> to vector<8x16x1xf32>
    %124 = vector.broadcast %123 : vector<8x16x1xf32> to vector<8x16x64xf32>
    %125 = arith.mulf %122, %124 : vector<8x16x64xf32>
    %cst_68 = arith.constant dense<0.000000e+00> : vector<8x64xf32>
    %126 = vector.multi_reduction <add>, %125, %cst_68 [1] : vector<8x16x64xf32> to vector<8x64xf32>
    %127 = arith.index_cast %98 : i32 to index
    %c0_69 = arith.constant 0 : index
    %128 = vector.load %arg23[%127, %c0_69] : memref<8x64xf32, #tpu.memory_space<vmem>>, vector<8x64xf32>
    tpu.vector_store %arg23[%127, %c0_69], %126 {strides = array<i32>} : memref<8x64xf32, #tpu.memory_space<vmem>>, vector<8x64xf32>,
    %c1_i32_70 = arith.constant 1 : i32
    %c0_71 = arith.constant 0 : index
    %c0_72 = arith.constant 0 : index
    %129 = vector.load %arg23[%c0_71, %c0_72] : memref<8x64xf32, #tpu.memory_space<vmem>>, vector<8x64xf32>
    %c0_73 = arith.constant 0 : index
    %c0_74 = arith.constant 0 : index
    %130 = vector.load %arg13[%c0_73, %c0_74] : memref<1x64xf32, #tpu.memory_space<vmem>>, vector<1x64xf32>
    %131 = vector.broadcast %130 : vector<1x64xf32> to vector<8x64xf32>
    %132 = arith.mulf %131, %66 : vector<8x64xf32>
    %133 = arith.addf %129, %132 : vector<8x64xf32>
    %134 = arith.negf %19 : vector<8x64xf32>
    %135 = math.exp %134 : vector<8x64xf32>
    %cst_75 = arith.constant 1.000000e+00 : f32
    %136 = vector.broadcast %cst_75 : f32 to vector<8x64xf32>
    %137 = arith.addf %136, %135 : vector<8x64xf32>
    %138 = arith.divf %136, %137 : vector<8x64xf32>
    %139 = arith.mulf %19, %138 : vector<8x64xf32>
    %140 = arith.mulf %133, %139 : vector<8x64xf32>
    %141 = arith.truncf %140 : vector<8x64xf32> to vector<8x64xbf16>
    %c0_76 = arith.constant 0 : index
    %c0_77 = arith.constant 0 : index
    %142 = vector.load %arg14[%c0_76, %c0_77] : memref<64x32xbf16, #tpu.memory_space<vmem>>, vector<64x32xbf16>
    %cst_78 = arith.constant dense<0.000000e+00> : vector<8x32xf32>
    %143 = tpu.matmul %141, %142, %cst_78 {dimension_numbers = #tpu.dot_dimension_numbers<[1], [0], [0], [1], [0, 0, 1, 1], [], []>} : vector<8x64xbf16>, vector<64x32xbf16>, vector<8x32xf32> -> vector<8x32xf32>
    %144 = arith.addf %1, %143 : vector<8x32xf32>
    %c0_79 = arith.constant 0 : index
    %c0_80 = arith.constant 0 : index
    %c0_81 = arith.constant 0 : index
    %145 = vector.load %arg15[%c0_79, %c0_80, %c0_81] : memref<1x8x32xf32, #tpu.memory_space<vmem>>, vector<1x8x32xf32>
    %146 = vector.shape_cast %145 : vector<1x8x32xf32> to vector<8x32xf32>
    %147 = vector.shape_cast %144 : vector<8x32xf32> to vector<1x8x32xf32>
    tpu.vector_store %arg15[%c0_79, %c0_80, %c0_81], %147 {strides = array<i32>} : memref<1x8x32xf32, #tpu.memory_space<vmem>>, vector<1x8x32xf32>,
    return
  }
  func.func @transform_0(%arg0: i32) -> (i32, i32, i32) {
    %c0_i32 = arith.constant 0 : i32
    %c0_i32_0 = arith.constant 0 : i32
    %c0_i32_1 = arith.constant 0 : i32
    return %arg0, %c0_i32, %c0_i32_0 : i32, i32, i32
  }
  func.func @transform_1(%arg0: i32) -> (i32, i32) {
    %c0_i32 = arith.constant 0 : i32
    %c0_i32_0 = arith.constant 0 : i32
    %c0_i32_1 = arith.constant 0 : i32
    return %c0_i32, %c0_i32_0 : i32, i32
  }
  func.func @transform_2(%arg0: i32) -> (i32, i32) {
    %c0_i32 = arith.constant 0 : i32
    %c0_i32_0 = arith.constant 0 : i32
    %c0_i32_1 = arith.constant 0 : i32
    return %c0_i32, %c0_i32_0 : i32, i32
  }
  func.func @transform_3(%arg0: i32) -> (i32, i32) {
    %c0_i32 = arith.constant 0 : i32
    %c0_i32_0 = arith.constant 0 : i32
    %c0_i32_1 = arith.constant 0 : i32
    return %c0_i32, %c0_i32_0 : i32, i32
  }
  func.func @transform_4(%arg0: i32) -> (i32, i32) {
    %c0_i32 = arith.constant 0 : i32
    %c0_i32_0 = arith.constant 0 : i32
    %c0_i32_1 = arith.constant 0 : i32
    return %c0_i32, %c0_i32_0 : i32, i32
  }
  func.func @transform_5(%arg0: i32) -> (i32, i32) {
    %c0_i32 = arith.constant 0 : i32
    %c0_i32_0 = arith.constant 0 : i32
    %c0_i32_1 = arith.constant 0 : i32
    return %c0_i32, %c0_i32_0 : i32, i32
  }
  func.func @transform_6(%arg0: i32) -> (i32, i32) {
    %c0_i32 = arith.constant 0 : i32
    %c0_i32_0 = arith.constant 0 : i32
    %c0_i32_1 = arith.constant 0 : i32
    return %c0_i32, %c0_i32_0 : i32, i32
  }
  func.func @transform_7(%arg0: i32) -> (i32, i32) {
    %c0_i32 = arith.constant 0 : i32
    %c0_i32_0 = arith.constant 0 : i32
    %c0_i32_1 = arith.constant 0 : i32
    return %c0_i32, %c0_i32_0 : i32, i32
  }
  func.func @transform_8(%arg0: i32) -> (i32, i32) {
    %c0_i32 = arith.constant 0 : i32
    %c0_i32_0 = arith.constant 0 : i32
    %c0_i32_1 = arith.constant 0 : i32
    return %c0_i32, %c0_i32_0 : i32, i32
  }
  func.func @transform_9(%arg0: i32) -> (i32, i32) {
    %c0_i32 = arith.constant 0 : i32
    %c0_i32_0 = arith.constant 0 : i32
    %c0_i32_1 = arith.constant 0 : i32
    return %c0_i32, %c0_i32_0 : i32, i32
  }
  func.func @transform_10(%arg0: i32) -> (i32, i32) {
    %c0_i32 = arith.constant 0 : i32
    %c0_i32_0 = arith.constant 0 : i32
    %c0_i32_1 = arith.constant 0 : i32
    return %c0_i32, %c0_i32_0 : i32, i32
  }
  func.func @transform_11(%arg0: i32) -> (i32, i32) {
    %c0_i32 = arith.constant 0 : i32
    %c0_i32_0 = arith.constant 0 : i32
    %c0_i32_1 = arith.constant 0 : i32
    return %c0_i32, %c0_i32_0 : i32, i32
  }
  func.func @transform_12(%arg0: i32) -> (i32, i32) {
    %c0_i32 = arith.constant 0 : i32
    %c0_i32_0 = arith.constant 0 : i32
    %c0_i32_1 = arith.constant 0 : i32
    return %c0_i32, %c0_i32_0 : i32, i32
  }
  func.func @transform_13(%arg0: i32) -> (i32, i32) {
    %c0_i32 = arith.constant 0 : i32
    %c0_i32_0 = arith.constant 0 : i32
    %c0_i32_1 = arith.constant 0 : i32
    return %c0_i32, %c0_i32_0 : i32, i32
  }
  func.func @transform_14(%arg0: i32) -> (i32, i32, i32) {
    %c0_i32 = arith.constant 0 : i32
    %c0_i32_0 = arith.constant 0 : i32
    %c0_i32_1 = arith.constant 0 : i32
    return %arg0, %c0_i32, %c0_i32_0 : i32, i32, i32
  }
}

</mosaic_0001>

<llo_original>
// kernel: net_forward.4
$region0: #{net_forward.4}
  #allocation0 [shape = 'u32[]', space=smem, size = 0x4, offset = 0x4, fixed_abs, tag = 'smem constant byte address 0x4 - core index']
  #allocation1 [shape = 'u32[72,128]{1,0:T(1,128)}', space=vmem, size = 0x9000, scoped, tag = 'internal scratch']
  #allocation2 [shape = 'f32[16,128]{1,0:T(8,128)}', space=vmem, size = 0x2000, scoped, tag = 'scratch operand']
  %s0 = inlined_call_operand.vmem [shape: bf16[16,128], index: 0, kind: input, shape index: {}]
  %s1 = inlined_call_operand.hbm [shape: bf16[128,128], index: 1, kind: input, shape index: {}]
  %s2 = inlined_call_operand.vmem [shape: f32[1,128], index: 2, kind: input, shape index: {}]
  %s3 = inlined_call_operand.vmem [shape: f32[16,128], index: 3, kind: output, shape index: {}]
  %s4 = sld [smem:[#allocation0]]
  $region34: #{net_forward.4} parent=0
    _
  %s6 = ssub.s32 1, %s4
  %s7 = scalar_select 0, %s6, %s4
  $region1: #{net_forward.4} parent=0
    #allocation3 [shape = 'u8[32768]{0}', space=vmem, size = 0x8000, scoped, tag = 'input window, operand 1, single buffered']
    #allocation4 [shape = 's32[1]{0}', space=sflag, size = 0x4, scoped, tag = 'scoped memory for net_forward.4']
    %8 = vsyncpa [#allocation4], 0
    // Predicated region
    $region2: #{net_forward.4} parent=1 // pred_check
      _
    $region3: #{net_forward.4} parent=1 // pred_check_branch
      %10 = sbr.rel (0) target = $region5
    $region4: #{net_forward.4} parent=1 // pred_region
      _
    $region5: #{net_forward.4} parent=1 // pred_fallthru
      _
    // Predicated region
    $region6: #{net_forward.4} parent=1 // pred_check
      _
    $region7: #{net_forward.4} parent=1 // pred_check_branch
      %12 = sbr.rel (0) target = $region9
    $region8: #{net_forward.4} parent=1 // pred_region
      %14 = vsyncadd [#allocation4], 0
      %s15 = sshll.u32 %s1, 4
      %s16 = int_to_ptr.hbm [resolvable:$true] %s15
      %s17 = sshll.u32 [#allocation3], 4
      %s18 = int_to_ptr.vmem [resolvable:$true] %s17
      %23 = dma.hbm_to_vmem [thread:$0]  %s16, 1024, %s18, [#allocation4], 64, 64, 4
    $region9: #{net_forward.4} parent=1 // pred_fallthru
      _
    // Predicated region
    $region10: #{net_forward.4} parent=1 // pred_check
      _
    $region11: #{net_forward.4} parent=1 // pred_check_branch
      %25 = sbr.rel (0) target = $region13
    $region12: #{net_forward.4} parent=1 // pred_region
      _
    $region13: #{net_forward.4} parent=1 // pred_fallthru
      _
    // Predicated region
    $region14: #{net_forward.4} parent=1 // pred_check
      _
    $region15: #{net_forward.4} parent=1 // pred_check_branch
      %27 = sbr.rel (0) target = $region17
    $region16: #{net_forward.4} parent=1 // pred_region
      %29 = dma.done [#allocation4], 1024
    $region17: #{net_forward.4} parent=1 // pred_fallthru
      _
    %p30 = scmp.eq.s32.totalorder 0, 0
    // Predicated region
    $region18: #{net_forward.4} parent=1 // pred_check
      %p31 = pneg %p30
    $region19: #{net_forward.4} parent=1 // pred_check_branch
      %33 = sbr.rel (%p31) target = $region21
    $region20: #{net_forward.4} parent=1 // pred_region
      %34 = vst [vmem:[#allocation2] sm:$0xff] 0.0
      %35 = vst [vmem:[#allocation2 + $0x8] sm:$0xff] 0.0
    $region21: #{net_forward.4} parent=1 // pred_fallthru
      _
    %v36 = vld [vmem:[#allocation2] sm:$0xff]
    %v37 = vld [vmem:[#allocation2 + $0x8] sm:$0xff]
    %v38 = vld [vmem:[%s0] sm:$0xf]
    %v39 = vld [vmem:[%s0 + $0x4] sm:$0xf]
    %v40 = vld [vmem:[#allocation3] sm:$0xf]
    %v41 = vld [vmem:[#allocation3 + $0x4] sm:$0xf]
    %v42 = vld [vmem:[#allocation3 + $0x8] sm:$0xf]
    %v43 = vld [vmem:[#allocation3 + $0xc] sm:$0xf]
    %v44 = vld [vmem:[#allocation3 + $0x10] sm:$0xf]
    %v45 = vld [vmem:[#allocation3 + $0x14] sm:$0xf]
    %v46 = vld [vmem:[#allocation3 + $0x18] sm:$0xf]
    %v47 = vld [vmem:[#allocation3 + $0x1c] sm:$0xf]
    %v48 = vld [vmem:[#allocation3 + $0x20] sm:$0xf]
    %v49 = vld [vmem:[#allocation3 + $0x24] sm:$0xf]
    %v50 = vld [vmem:[#allocation3 + $0x28] sm:$0xf]
    %v51 = vld [vmem:[#allocation3 + $0x2c] sm:$0xf]
    %v52 = vld [vmem:[#allocation3 + $0x30] sm:$0xf]
    %v53 = vld [vmem:[#allocation3 + $0x34] sm:$0xf]
    %v54 = vld [vmem:[#allocation3 + $0x38] sm:$0xf]
    %v55 = vld [vmem:[#allocation3 + $0x3c] sm:$0xf]
    %v58 = vunpack.c.l.b16 %v38
    %v59 = vunpack.c.l.b16 %v39
    %v60 = vpack.c.b16 %v59, %v58
    %v78 = vunpack.c.l.b16 %v40
    %v79 = vunpack.c.l.b16 %v41
    %v80 = vunpack.c.l.b16 %v42
    %v81 = vunpack.c.l.b16 %v43
    %v82 = vunpack.c.l.b16 %v44
    %v83 = vunpack.c.l.b16 %v45
    %v84 = vunpack.c.l.b16 %v46
    %v85 = vunpack.c.l.b16 %v47
    %v86 = vunpack.c.l.b16 %v48
    %v87 = vunpack.c.l.b16 %v49
    %v88 = vunpack.c.l.b16 %v50
    %v89 = vunpack.c.l.b16 %v51
    %v90 = vunpack.c.l.b16 %v52
    %v91 = vunpack.c.l.b16 %v53
    %v92 = vunpack.c.l.b16 %v54
    %v93 = vunpack.c.l.b16 %v55
    %v94 = vpack.c.b16 %v79, %v78
    %v95 = vpack.c.b16 %v81, %v80
    %v96 = vpack.c.b16 %v83, %v82
    %v97 = vpack.c.b16 %v85, %v84
    %v98 = vpack.c.b16 %v87, %v86
    %v99 = vpack.c.b16 %v89, %v88
    %v100 = vpack.c.b16 %v91, %v90
    %v101 = vpack.c.b16 %v93, %v92
    %110 = vmatpush.bf16.msra.mxu0 %v101
    %111 = vmatpush.bf16.msra.mxu0 %v100
    %112 = vmatpush.bf16.msra.mxu0 %v99
    %113 = vmatpush.bf16.msra.mxu0 %v98
    %114 = vmatpush.bf16.msra.mxu0 %v97
    %115 = vmatpush.bf16.msra.mxu0 %v96
    %116 = vmatpush.bf16.msra.mxu0 %v95
    %117 = vmatpush.bf16.msra.mxu0 %v94
    %118 = vmatmul.bf16.gmra.mxu0 %v60
    %v119 = vpop.f32.mrf.mxu0
    %v120 = vadd.f32 0.0, %v119
    %v121 = vpop.f32.mrf.mxu0
    %v122 = vadd.f32 0.0, %v121
    %123 = vdwg.mxu0
    %v124 = vadd.f32 %v36, %v120
    %v125 = vadd.f32 %v37, %v122
    %126 = vst [vmem:[#allocation2] sm:$0xff] %v124
    %127 = vst [vmem:[#allocation2 + $0x8] sm:$0xff] %v125
    // Predicated region
    $region22: #{net_forward.4} parent=1 // pred_check
      %p128 = pneg %p30
    $region23: #{net_forward.4} parent=1 // pred_check_branch
      %130 = sbr.rel (%p128) target = $region25
    $region24: #{net_forward.4} parent=1 // pred_region
      %v131 = vld [vmem:[#allocation2] sm:$0xff]
      %v132 = vld [vmem:[#allocation2 + $0x8] sm:$0xff]
      %v133 = vld [vmem:[%s2] sm:$0x1]
      %v135 = vperm.slane %v133, 0
      %v137 = vadd.f32 %v131, %v135
      %v138 = vadd.f32 %v132, %v135
      %139 = vst [vmem:[%s3] sm:$0xff] %v137
      %140 = vst [vmem:[%s3 + $0x8] sm:$0xff] %v138
    $region25: #{net_forward.4} parent=1 // pred_fallthru
      _
    // Predicated region
    $region26: #{net_forward.4} parent=1 // pred_check
      _
    $region27: #{net_forward.4} parent=1 // pred_check_branch
      %142 = sbr.rel (0) target = $region29
    $region28: #{net_forward.4} parent=1 // pred_region
      _
    $region29: #{net_forward.4} parent=1 // pred_fallthru
      _
    // Predicated region
    $region30: #{net_forward.4} parent=1 // pred_check
      _
    $region31: #{net_forward.4} parent=1 // pred_check_branch
      %144 = sbr.rel (0) target = $region33
    $region32: #{net_forward.4} parent=1 // pred_region
      _
    $region33: #{net_forward.4} parent=1 // pred_fallthru
      _
    %145 = vsyncpa [#allocation4], 1

// kernel: net_forward.7
$region0: #{net_forward.7}
  #allocation0 [shape = 'u32[]', space=smem, size = 0x4, offset = 0x4, fixed_abs, tag = 'smem constant byte address 0x4 - core index']
  #allocation1 [shape = 'u32[72,128]{1,0:T(1,128)}', space=vmem, size = 0x9000, scoped, tag = 'internal scratch']
  #allocation2 [shape = 'f32[16,128]{1,0:T(8,128)}', space=vmem, size = 0x2000, scoped, tag = 'scratch operand']
  %s0 = inlined_call_operand.vmem [shape: bf16[16,128], index: 0, kind: input, shape index: {}]
  %s1 = inlined_call_operand.vmem [shape: bf16[128,128], index: 1, kind: input, shape index: {}]
  %s2 = inlined_call_operand.vmem [shape: f32[1,128], index: 2, kind: input, shape index: {}]
  %s3 = inlined_call_operand.vmem [shape: f32[16,128], index: 3, kind: output, shape index: {}]
  %s4 = sld [smem:[#allocation0]]
  $region30: #{net_forward.7} parent=0
    _
  %s6 = ssub.s32 1, %s4
  %s7 = scalar_select 0, %s6, %s4
  // Predicated region
  $region2: #{net_forward.7} parent=0 // pred_check
    _
  $region3: #{net_forward.7} parent=0 // pred_check_branch
    %9 = sbr.rel (0) target = $region5
  $region4: #{net_forward.7} parent=0 // pred_region
    _
  $region5: #{net_forward.7} parent=0 // pred_fallthru
    _
  // Predicated region
  $region6: #{net_forward.7} parent=0 // pred_check
    _
  $region7: #{net_forward.7} parent=0 // pred_check_branch
    %11 = sbr.rel (0) target = $region9
  $region8: #{net_forward.7} parent=0 // pred_region
    _
  $region9: #{net_forward.7} parent=0 // pred_fallthru
    _
  // Predicated region
  $region10: #{net_forward.7} parent=0 // pred_check
    _
  $region11: #{net_forward.7} parent=0 // pred_check_branch
    %13 = sbr.rel (0) target = $region13
  $region12: #{net_forward.7} parent=0 // pred_region
    _
  $region13: #{net_forward.7} parent=0 // pred_fallthru
    _
  %p14 = scmp.eq.s32.totalorder 0, 0
  // Predicated region
  $region14: #{net_forward.7} parent=0 // pred_check
    %p15 = pneg %p14
  $region15: #{net_forward.7} parent=0 // pred_check_branch
    %17 = sbr.rel (%p15) target = $region17
  $region16: #{net_forward.7} parent=0 // pred_region
    %18 = vst [vmem:[#allocation2] sm:$0xff] 0.0
    %19 = vst [vmem:[#allocation2 + $0x8] sm:$0xff] 0.0
  $region17: #{net_forward.7} parent=0 // pred_fallthru
    _
  %v20 = vld [vmem:[#allocation2] sm:$0xff]
  %v21 = vld [vmem:[#allocation2 + $0x8] sm:$0xff]
  %v22 = vld [vmem:[%s0] sm:$0xf]
  %v23 = vld [vmem:[%s0 + $0x4] sm:$0xf]
  %v24 = vld [vmem:[%s1] sm:$0xf]
  %v25 = vld [vmem:[%s1 + $0x4] sm:$0xf]
  %v26 = vld [vmem:[%s1 + $0x8] sm:$0xf]
  %v27 = vld [vmem:[%s1 + $0xc] sm:$0xf]
  %v28 = vld [vmem:[%s1 + $0x10] sm:$0xf]
  %v29 = vld [vmem:[%s1 + $0x14] sm:$0xf]
  %v30 = vld [vmem:[%s1 + $0x18] sm:$0xf]
  %v31 = vld [vmem:[%s1 + $0x1c] sm:$0xf]
  %v32 = vld [vmem:[%s1 + $0x20] sm:$0xf]
  %v33 = vld [vmem:[%s1 + $0x24] sm:$0xf]
  %v34 = vld [vmem:[%s1 + $0x28] sm:$0xf]
  %v35 = vld [vmem:[%s1 + $0x2c] sm:$0xf]
  %v36 = vld [vmem:[%s1 + $0x30] sm:$0xf]
  %v37 = vld [vmem:[%s1 + $0x34] sm:$0xf]
  %v38 = vld [vmem:[%s1 + $0x38] sm:$0xf]
  %v39 = vld [vmem:[%s1 + $0x3c] sm:$0xf]
  %v42 = vunpack.c.l.b16 %v22
  %v43 = vunpack.c.l.b16 %v23
  %v44 = vpack.c.b16 %v43, %v42
  %v62 = vunpack.c.l.b16 %v24
  %v63 = vunpack.c.l.b16 %v25
  %v64 = vunpack.c.l.b16 %v26
  %v65 = vunpack.c.l.b16 %v27
  %v66 = vunpack.c.l.b16 %v28
  %v67 = vunpack.c.l.b16 %v29
  %v68 = vunpack.c.l.b16 %v30
  %v69 = vunpack.c.l.b16 %v31
  %v70 = vunpack.c.l.b16 %v32
  %v71 = vunpack.c.l.b16 %v33
  %v72 = vunpack.c.l.b16 %v34
  %v73 = vunpack.c.l.b16 %v35
  %v74 = vunpack.c.l.b16 %v36
  %v75 = vunpack.c.l.b16 %v37
  %v76 = vunpack.c.l.b16 %v38
  %v77 = vunpack.c.l.b16 %v39
  %v78 = vpack.c.b16 %v63, %v62
  %v79 = vpack.c.b16 %v65, %v64
  %v80 = vpack.c.b16 %v67, %v66
  %v81 = vpack.c.b16 %v69, %v68
  %v82 = vpack.c.b16 %v71, %v70
  %v83 = vpack.c.b16 %v73, %v72
  %v84 = vpack.c.b16 %v75, %v74
  %v85 = vpack.c.b16 %v77, %v76
  %94 = vmatpush.bf16.msra.mxu0 %v85
  %95 = vmatpush.bf16.msra.mxu0 %v84
  %96 = vmatpush.bf16.msra.mxu0 %v83
  %97 = vmatpush.bf16.msra.mxu0 %v82
  %98 = vmatpush.bf16.msra.mxu0 %v81
  %99 = vmatpush.bf16.msra.mxu0 %v80
  %100 = vmatpush.bf16.msra.mxu0 %v79
  %101 = vmatpush.bf16.msra.mxu0 %v78
  %102 = vmatmul.bf16.gmra.mxu0 %v44
  %v103 = vpop.f32.mrf.mxu0
  %v104 = vadd.f32 0.0, %v103
  %v105 = vpop.f32.mrf.mxu0
  %v106 = vadd.f32 0.0, %v105
  %107 = vdwg.mxu0
  %v108 = vadd.f32 %v20, %v104
  %v109 = vadd.f32 %v21, %v106
  %110 = vst [vmem:[#allocation2] sm:$0xff] %v108
  %111 = vst [vmem:[#allocation2 + $0x8] sm:$0xff] %v109
  // Predicated region
  $region18: #{net_forward.7} parent=0 // pred_check
    %p112 = pneg %p14
  $region19: #{net_forward.7} parent=0 // pred_check_branch
    %114 = sbr.rel (%p112) target = $region21
  $region20: #{net_forward.7} parent=0 // pred_region
    %v115 = vld [vmem:[#allocation2] sm:$0xff]
    %v116 = vld [vmem:[#allocation2 + $0x8] sm:$0xff]
    %v117 = vld [vmem:[%s2] sm:$0x1]
    %v119 = vperm.slane %v117, 0
    %v121 = vadd.f32 %v115, %v119
    %v122 = vadd.f32 %v116, %v119
    %v123 = vtanh.pop %v121
    %v124 = vtanh.pop %v122
    %125 = vst [vmem:[%s3] sm:$0xff] %v123
    %126 = vst [vmem:[%s3 + $0x8] sm:$0xff] %v124
  $region21: #{net_forward.7} parent=0 // pred_fallthru
    _
  // Predicated region
  $region22: #{net_forward.7} parent=0 // pred_check
    _
  $region23: #{net_forward.7} parent=0 // pred_check_branch
    %128 = sbr.rel (0) target = $region25
  $region24: #{net_forward.7} parent=0 // pred_region
    _
  $region25: #{net_forward.7} parent=0 // pred_fallthru
    _
  // Predicated region
  $region26: #{net_forward.7} parent=0 // pred_check
    _
  $region27: #{net_forward.7} parent=0 // pred_check_branch
    %130 = sbr.rel (0) target = $region29
  $region28: #{net_forward.7} parent=0 // pred_region
    _
  $region29: #{net_forward.7} parent=0 // pred_fallthru
    _

// kernel: net_forward.5
$region0: #{net_forward.5}
  #allocation0 [shape = 'u32[]', space=smem, size = 0x4, offset = 0x4, fixed_abs, tag = 'smem constant byte address 0x4 - core index']
  #allocation1 [shape = 'u32[72,128]{1,0:T(1,128)}', space=vmem, size = 0x9000, scoped, tag = 'internal scratch']
  #allocation2 [shape = 'f32[8,64]{1,0:T(8,128)}', space=vmem, size = 0x1000, scoped, tag = 'scratch operand']
  #allocation3 [shape = 'f32[8,64]{1,0:T(8,128)}', space=vmem, size = 0x1000, scoped, tag = 'scratch operand']
  #allocation4 [shape = 'f32[8,16]{1,0:T(8,128)}', space=vmem, size = 0x1000, scoped, tag = 'scratch operand']
  #allocation5 [shape = 'f32[8,16]{1,0:T(8,128)}', space=vmem, size = 0x1000, scoped, tag = 'scratch operand']
  #allocation6 [shape = 'f32[8,16,64]{2,1,0:T(8,128)}', space=vmem, size = 0x10000, scoped, tag = 'scratch operand']
  #allocation7 [shape = 'f32[8,16,64]{2,1,0:T(8,128)}', space=vmem, size = 0x10000, scoped, tag = 'scratch operand']
  #allocation8 [shape = 'f32[8,16,64]{2,1,0:T(8,128)}', space=vmem, size = 0x10000, scoped, tag = 'scratch operand']
  #allocation9 [shape = 'f32[8,64]{1,0:T(8,128)}', space=vmem, size = 0x1000, scoped, tag = 'scratch operand']
  %s0 = inlined_call_operand.vmem [shape: f32[2,8,32], index: 0, kind: input, shape index: {}]
  %s1 = inlined_call_operand.vmem [shape: f32[1,32], index: 1, kind: input, shape index: {}]
  %s2 = inlined_call_operand.vmem [shape: bf16[32,64], index: 2, kind: input, shape index: {}]
  %s3 = inlined_call_operand.vmem [shape: bf16[32,64], index: 3, kind: input, shape index: {}]
  %s4 = inlined_call_operand.vmem [shape: f32[4,64], index: 4, kind: input, shape index: {}]
  %s5 = inlined_call_operand.vmem [shape: f32[1,64], index: 5, kind: input, shape index: {}]
  %s6 = inlined_call_operand.vmem [shape: bf16[64,2], index: 6, kind: input, shape index: {}]
  %s7 = inlined_call_operand.vmem [shape: bf16[64,16], index: 7, kind: input, shape index: {}]
  %s8 = inlined_call_operand.vmem [shape: bf16[64,16], index: 8, kind: input, shape index: {}]
  %s9 = inlined_call_operand.vmem [shape: bf16[2,64], index: 9, kind: input, shape index: {}]
  %s10 = inlined_call_operand.vmem [shape: f32[1,64], index: 10, kind: input, shape index: {}]
  %s11 = inlined_call_operand.vmem [shape: f32[16,64], index: 11, kind: input, shape index: {}]
  %s12 = inlined_call_operand.vmem [shape: f32[1,64], index: 12, kind: input, shape index: {}]
  %s13 = inlined_call_operand.vmem [shape: bf16[64,32], index: 13, kind: input, shape index: {}]
  %s14 = inlined_call_operand.vmem [shape: f32[2,8,32], index: 14, kind: output, shape index: {}]
  %s15 = sld [smem:[#allocation0]]
  $region96: #{net_forward.5} parent=0
    _
  %s17 = ssub.s32 1, %s15
  %s18 = scalar_select 0, %s17, %s15
  loop: start=0, step=1, limit=4
  $region2: #{net_forward.5} parent=0 // loop_pre_header
    _
  $region3: #{net_forward.5} parent=0 // loop_header
    %s20 = sphi 0, %s24
    %p21 = scmp.ge.s32.totalorder %s20, 4
    %s30 = sphi 0, %s32
    %s33 = sphi 0, %s30
    %s34 = sphi 0, %s33
    %s50 = sphi 0, %s34
    %s54 = sphi 0, %s54
    %s56 = sphi 0, %s54
    %s57 = sphi 0, %s56
    %s71 = sphi 0, %s57
    %s75 = sphi 0, %s75
    %s77 = sphi 0, %s75
    %s78 = sphi 0, %s77
    %s92 = sphi 0, %s78
    %s96 = sphi 0, %s96
    %s98 = sphi 0, %s96
    %s99 = sphi 0, %s98
    %s113 = sphi 0, %s99
    %s117 = sphi 0, %s117
    %s119 = sphi 0, %s117
    %s120 = sphi 0, %s119
    %s134 = sphi 0, %s120
    %s138 = sphi 0, %s138
    %s140 = sphi 0, %s138
    %s141 = sphi 0, %s140
    %s155 = sphi 0, %s141
    %s159 = sphi 0, %s159
    %s161 = sphi 0, %s159
    %s162 = sphi 0, %s161
    %s176 = sphi 0, %s162
    %s180 = sphi 0, %s180
    %s182 = sphi 0, %s180
    %s183 = sphi 0, %s182
    %s197 = sphi 0, %s183
    %s201 = sphi 0, %s201
    %s203 = sphi 0, %s201
    %s204 = sphi 0, %s203
    %s218 = sphi 0, %s204
    %s222 = sphi 0, %s222
    %s224 = sphi 0, %s222
    %s225 = sphi 0, %s224
    %s239 = sphi 0, %s225
    %s243 = sphi 0, %s243
    %s245 = sphi 0, %s243
    %s246 = sphi 0, %s245
    %s260 = sphi 0, %s246
    %s264 = sphi 0, %s264
    %s266 = sphi 0, %s264
    %s267 = sphi 0, %s266
    %s281 = sphi 0, %s267
    %s285 = sphi 0, %s285
    %s287 = sphi 0, %s285
    %s288 = sphi 0, %s287
    %s302 = sphi 0, %s288
    %s306 = sphi 0, %s306
    %s308 = sphi 0, %s306
    %s309 = sphi 0, %s308
    %s323 = sphi 0, %s309
    %s329 = sphi 0, %s331
    %s332 = sphi 0, %s329
    %s333 = sphi 0, %s332
    %s349 = sphi 0, %s333
  $region4: #{net_forward.5} parent=0 // loop_header_branch
    %23 = sbr.rel (%p21) target = $region8
  $region5: #{net_forward.5} parent=0 // loop_body
    %s25 = ssub.s32 %s20, 1
    %s26 = ssub.s32 %s20, 2
    %s27 = sadd.s32 %s20, 1
    %s28 = ssub.s32 %s20, %s27
    %p29 = scmp.eq.s32.totalorder %s28, 0
    %s31 = sadd.s32 %s30, 1
    %s32 = scalar_select %p29, %s30, %s31
    %p35 = pneg %p29
    %p36 = scmp.eq.s32.totalorder %s20, 1
    %p37 = por %p35, %p36
    %p38 = scmp.ne.s32.totalorder %s30, %s33
    %p39 = scmp.eq.s32.totalorder %s20, 0
    %p40 = por %p38, %p39
    %p41 = scmp.ne.s32.totalorder %s30, %s33
    %p42 = scmp.eq.s32.totalorder %s25, 1
    %p43 = por %p41, %p42
    %p44 = scmp.ne.s32.totalorder %s33, %s34
    %p45 = scmp.eq.s32.totalorder %s25, 0
    %p46 = por %p44, %p45
    %p47 = scmp.ne.s32.totalorder %s33, %s34
    %p48 = scmp.eq.s32.totalorder %s26, 1
    %p49 = por %p47, %p48
    %p51 = scmp.ne.s32.totalorder %s34, %s50
    %p52 = scmp.eq.s32.totalorder %s26, 0
    %p53 = por %p51, %p52
    %s55 = sadd.s32 %s54, 1
    %p58 = scmp.eq.s32.totalorder %s20, 1
    %p59 = scmp.ne.s32.totalorder %s54, %s56
    %p60 = scmp.eq.s32.totalorder %s20, 0
    %p61 = por %p59, %p60
    %p62 = scmp.ne.s32.totalorder %s54, %s56
    %p63 = scmp.eq.s32.totalorder %s25, 1
    %p64 = por %p62, %p63
    %p65 = scmp.ne.s32.totalorder %s56, %s57
    %p66 = scmp.eq.s32.totalorder %s25, 0
    %p67 = por %p65, %p66
    %p68 = scmp.ne.s32.totalorder %s56, %s57
    %p69 = scmp.eq.s32.totalorder %s26, 1
    %p70 = por %p68, %p69
    %p72 = scmp.ne.s32.totalorder %s57, %s71
    %p73 = scmp.eq.s32.totalorder %s26, 0
    %p74 = por %p72, %p73
    %s76 = sadd.s32 %s75, 1
    %p79 = scmp.eq.s32.totalorder %s20, 1
    %p80 = scmp.ne.s32.totalorder %s75, %s77
    %p81 = scmp.eq.s32.totalorder %s20, 0
    %p82 = por %p80, %p81
    %p83 = scmp.ne.s32.totalorder %s75, %s77
    %p84 = scmp.eq.s32.totalorder %s25, 1
    %p85 = por %p83, %p84
    %p86 = scmp.ne.s32.totalorder %s77, %s78
    %p87 = scmp.eq.s32.totalorder %s25, 0
    %p88 = por %p86, %p87
    %p89 = scmp.ne.s32.totalorder %s77, %s78
    %p90 = scmp.eq.s32.totalorder %s26, 1
    %p91 = por %p89, %p90
    %p93 = scmp.ne.s32.totalorder %s78, %s92
    %p94 = scmp.eq.s32.totalorder %s26, 0
    %p95 = por %p93, %p94
    %s97 = sadd.s32 %s96, 1
    %p100 = scmp.eq.s32.totalorder %s20, 1
    %p101 = scmp.ne.s32.totalorder %s96, %s98
    %p102 = scmp.eq.s32.totalorder %s20, 0
    %p103 = por %p101, %p102
    %p104 = scmp.ne.s32.totalorder %s96, %s98
    %p105 = scmp.eq.s32.totalorder %s25, 1
    %p106 = por %p104, %p105
    %p107 = scmp.ne.s32.totalorder %s98, %s99
    %p108 = scmp.eq.s32.totalorder %s25, 0
    %p109 = por %p107, %p108
    %p110 = scmp.ne.s32.totalorder %s98, %s99
    %p111 = scmp.eq.s32.totalorder %s26, 1
    %p112 = por %p110, %p111
    %p114 = scmp.ne.s32.totalorder %s99, %s113
    %p115 = scmp.eq.s32.totalorder %s26, 0
    %p116 = por %p114, %p115
    %s118 = sadd.s32 %s117, 1
    %p121 = scmp.eq.s32.totalorder %s20, 1
    %p122 = scmp.ne.s32.totalorder %s117, %s119
    %p123 = scmp.eq.s32.totalorder %s20, 0
    %p124 = por %p122, %p123
    %p125 = scmp.ne.s32.totalorder %s117, %s119
    %p126 = scmp.eq.s32.totalorder %s25, 1
    %p127 = por %p125, %p126
    %p128 = scmp.ne.s32.totalorder %s119, %s120
    %p129 = scmp.eq.s32.totalorder %s25, 0
    %p130 = por %p128, %p129
    %p131 = scmp.ne.s32.totalorder %s119, %s120
    %p132 = scmp.eq.s32.totalorder %s26, 1
    %p133 = por %p131, %p132
    %p135 = scmp.ne.s32.totalorder %s120, %s134
    %p136 = scmp.eq.s32.totalorder %s26, 0
    %p137 = por %p135, %p136
    %s139 = sadd.s32 %s138, 1
    %p142 = scmp.eq.s32.totalorder %s20, 1
    %p143 = scmp.ne.s32.totalorder %s138, %s140
    %p144 = scmp.eq.s32.totalorder %s20, 0
    %p145 = por %p143, %p144
    %p146 = scmp.ne.s32.totalorder %s138, %s140
    %p147 = scmp.eq.s32.totalorder %s25, 1
    %p148 = por %p146, %p147
    %p149 = scmp.ne.s32.totalorder %s140, %s141
    %p150 = scmp.eq.s32.totalorder %s25, 0
    %p151 = por %p149, %p150
    %p152 = scmp.ne.s32.totalorder %s140, %s141
    %p153 = scmp.eq.s32.totalorder %s26, 1
    %p154 = por %p152, %p153
    %p156 = scmp.ne.s32.totalorder %s141, %s155
    %p157 = scmp.eq.s32.totalorder %s26, 0
    %p158 = por %p156, %p157
    %s160 = sadd.s32 %s159, 1
    %p163 = scmp.eq.s32.totalorder %s20, 1
    %p164 = scmp.ne.s32.totalorder %s159, %s161
    %p165 = scmp.eq.s32.totalorder %s20, 0
    %p166 = por %p164, %p165
    %p167 = scmp.ne.s32.totalorder %s159, %s161
    %p168 = scmp.eq.s32.totalorder %s25, 1
    %p169 = por %p167, %p168
    %p170 = scmp.ne.s32.totalorder %s161, %s162
    %p171 = scmp.eq.s32.totalorder %s25, 0
    %p172 = por %p170, %p171
    %p173 = scmp.ne.s32.totalorder %s161, %s162
    %p174 = scmp.eq.s32.totalorder %s26, 1
    %p175 = por %p173, %p174
    %p177 = scmp.ne.s32.totalorder %s162, %s176
    %p178 = scmp.eq.s32.totalorder %s26, 0
    %p179 = por %p177, %p178
    %s181 = sadd.s32 %s180, 1
    %p184 = scmp.eq.s32.totalorder %s20, 1
    %p185 = scmp.ne.s32.totalorder %s180, %s182
    %p186 = scmp.eq.s32.totalorder %s20, 0
    %p187 = por %p185, %p186
    %p188 = scmp.ne.s32.totalorder %s180, %s182
    %p189 = scmp.eq.s32.totalorder %s25, 1
    %p190 = por %p188, %p189
    %p191 = scmp.ne.s32.totalorder %s182, %s183
    %p192 = scmp.eq.s32.totalorder %s25, 0
    %p193 = por %p191, %p192
    %p194 = scmp.ne.s32.totalorder %s182, %s183
    %p195 = scmp.eq.s32.totalorder %s26, 1
    %p196 = por %p194, %p195
    %p198 = scmp.ne.s32.totalorder %s183, %s197
    %p199 = scmp.eq.s32.totalorder %s26, 0
    %p200 = por %p198, %p199
    %s202 = sadd.s32 %s201, 1
    %p205 = scmp.eq.s32.totalorder %s20, 1
    %p206 = scmp.ne.s32.totalorder %s201, %s203
    %p207 = scmp.eq.s32.totalorder %s20, 0
    %p208 = por %p206, %p207
    %p209 = scmp.ne.s32.totalorder %s201, %s203
    %p210 = scmp.eq.s32.totalorder %s25, 1
    %p211 = por %p209, %p210
    %p212 = scmp.ne.s32.totalorder %s203, %s204
    %p213 = scmp.eq.s32.totalorder %s25, 0
    %p214 = por %p212, %p213
    %p215 = scmp.ne.s32.totalorder %s203, %s204
    %p216 = scmp.eq.s32.totalorder %s26, 1
    %p217 = por %p215, %p216
    %p219 = scmp.ne.s32.totalorder %s204, %s218
    %p220 = scmp.eq.s32.totalorder %s26, 0
    %p221 = por %p219, %p220
    %s223 = sadd.s32 %s222, 1
    %p226 = scmp.eq.s32.totalorder %s20, 1
    %p227 = scmp.ne.s32.totalorder %s222, %s224
    %p228 = scmp.eq.s32.totalorder %s20, 0
    %p229 = por %p227, %p228
    %p230 = scmp.ne.s32.totalorder %s222, %s224
    %p231 = scmp.eq.s32.totalorder %s25, 1
    %p232 = por %p230, %p231
    %p233 = scmp.ne.s32.totalorder %s224, %s225
    %p234 = scmp.eq.s32.totalorder %s25, 0
    %p235 = por %p233, %p234
    %p236 = scmp.ne.s32.totalorder %s224, %s225
    %p237 = scmp.eq.s32.totalorder %s26, 1
    %p238 = por %p236, %p237
    %p240 = scmp.ne.s32.totalorder %s225, %s239
    %p241 = scmp.eq.s32.totalorder %s26, 0
    %p242 = por %p240, %p241
    %s244 = sadd.s32 %s243, 1
    %p247 = scmp.eq.s32.totalorder %s20, 1
    %p248 = scmp.ne.s32.totalorder %s243, %s245
    %p249 = scmp.eq.s32.totalorder %s20, 0
    %p250 = por %p248, %p249
    %p251 = scmp.ne.s32.totalorder %s243, %s245
    %p252 = scmp.eq.s32.totalorder %s25, 1
    %p253 = por %p251, %p252
    %p254 = scmp.ne.s32.totalorder %s245, %s246
    %p255 = scmp.eq.s32.totalorder %s25, 0
    %p256 = por %p254, %p255
    %p257 = scmp.ne.s32.totalorder %s245, %s246
    %p258 = scmp.eq.s32.totalorder %s26, 1
    %p259 = por %p257, %p258
    %p261 = scmp.ne.s32.totalorder %s246, %s260
    %p262 = scmp.eq.s32.totalorder %s26, 0
    %p263 = por %p261, %p262
    %s265 = sadd.s32 %s264, 1
    %p268 = scmp.eq.s32.totalorder %s20, 1
    %p269 = scmp.ne.s32.totalorder %s264, %s266
    %p270 = scmp.eq.s32.totalorder %s20, 0
    %p271 = por %p269, %p270
    %p272 = scmp.ne.s32.totalorder %s264, %s266
    %p273 = scmp.eq.s32.totalorder %s25, 1
    %p274 = por %p272, %p273
    %p275 = scmp.ne.s32.totalorder %s266, %s267
    %p276 = scmp.eq.s32.totalorder %s25, 0
    %p277 = por %p275, %p276
    %p278 = scmp.ne.s32.totalorder %s266, %s267
    %p279 = scmp.eq.s32.totalorder %s26, 1
    %p280 = por %p278, %p279
    %p282 = scmp.ne.s32.totalorder %s267, %s281
    %p283 = scmp.eq.s32.totalorder %s26, 0
    %p284 = por %p282, %p283
    %s286 = sadd.s32 %s285, 1
    %p289 = scmp.eq.s32.totalorder %s20, 1
    %p290 = scmp.ne.s32.totalorder %s285, %s287
    %p291 = scmp.eq.s32.totalorder %s20, 0
    %p292 = por %p290, %p291
    %p293 = scmp.ne.s32.totalorder %s285, %s287
    %p294 = scmp.eq.s32.totalorder %s25, 1
    %p295 = por %p293, %p294
    %p296 = scmp.ne.s32.totalorder %s287, %s288
    %p297 = scmp.eq.s32.totalorder %s25, 0
    %p298 = por %p296, %p297
    %p299 = scmp.ne.s32.totalorder %s287, %s288
    %p300 = scmp.eq.s32.totalorder %s26, 1
    %p301 = por %p299, %p300
    %p303 = scmp.ne.s32.totalorder %s288, %s302
    %p304 = scmp.eq.s32.totalorder %s26, 0
    %p305 = por %p303, %p304
    %s307 = sadd.s32 %s306, 1
    %p310 = scmp.eq.s32.totalorder %s20, 1
    %p311 = scmp.ne.s32.totalorder %s306, %s308
    %p312 = scmp.eq.s32.totalorder %s20, 0
    %p313 = por %p311, %p312
    %p314 = scmp.ne.s32.totalorder %s306, %s308
    %p315 = scmp.eq.s32.totalorder %s25, 1
    %p316 = por %p314, %p315
    %p317 = scmp.ne.s32.totalorder %s308, %s309
    %p318 = scmp.eq.s32.totalorder %s25, 0
    %p319 = por %p317, %p318
    %p320 = scmp.ne.s32.totalorder %s308, %s309
    %p321 = scmp.eq.s32.totalorder %s26, 1
    %p322 = por %p320, %p321
    %p324 = scmp.ne.s32.totalorder %s309, %s323
    %p325 = scmp.eq.s32.totalorder %s26, 0
    %p326 = por %p324, %p325
    %s327 = ssub.s32 %s20, %s27
    %p328 = scmp.eq.s32.totalorder %s327, 0
    %s330 = sadd.s32 %s329, 1
    %s331 = scalar_select %p328, %s329, %s330
    %p334 = pneg %p328
    %p335 = scmp.eq.s32.totalorder %s20, 1
    %p336 = por %p334, %p335
    %p337 = scmp.ne.s32.totalorder %s329, %s332
    %p338 = scmp.eq.s32.totalorder %s20, 0
    %p339 = por %p337, %p338
    %p340 = scmp.ne.s32.totalorder %s329, %s332
    %p341 = scmp.eq.s32.totalorder %s25, 1
    %p342 = por %p340, %p341
    %p343 = scmp.ne.s32.totalorder %s332, %s333
    %p344 = scmp.eq.s32.totalorder %s25, 0
    %p345 = por %p343, %p344
    %p346 = scmp.ne.s32.totalorder %s332, %s333
    %p347 = scmp.eq.s32.totalorder %s26, 1
    %p348 = por %p346, %p347
    %p350 = scmp.ne.s32.totalorder %s333, %s349
    %p351 = scmp.eq.s32.totalorder %s26, 0
    %p352 = por %p350, %p351
    %p353 = scmp.le.s32.totalorder 1, %s20
    %p354 = scmp.lt.s32.totalorder %s20, 3
    %p355 = pnand %p353, %p354
    %p356 = pneg %p355
    // Predicated region
    $region9: #{net_forward.5} parent=5 // pred_check
      _
    $region10: #{net_forward.5} parent=5 // pred_check_branch
      %358 = sbr.rel (%p355) target = $region12
    $region11: #{net_forward.5} parent=5 // pred_region
      %s359 = ssub.s32 %s20, 1
      // Predicated region
      $region13: #{net_forward.5} parent=11 // pred_check
        %p360 = pneg %p67
      $region14: #{net_forward.5} parent=11 // pred_check_branch
        %362 = sbr.rel (%p360) target = $region16
      $region15: #{net_forward.5} parent=11 // pred_region
        _
      $region16: #{net_forward.5} parent=11 // pred_fallthru
        _
      // Predicated region
      $region17: #{net_forward.5} parent=11 // pred_check
        %p363 = pneg %p88
      $region18: #{net_forward.5} parent=11 // pred_check_branch
        %365 = sbr.rel (%p363) target = $region20
      $region19: #{net_forward.5} parent=11 // pred_region
        _
      $region20: #{net_forward.5} parent=11 // pred_fallthru
        _
      // Predicated region
      $region21: #{net_forward.5} parent=11 // pred_check
        %p366 = pneg %p109
      $region22: #{net_forward.5} parent=11 // pred_check_branch
        %368 = sbr.rel (%p366) target = $region24
      $region23: #{net_forward.5} parent=11 // pred_region
        _
      $region24: #{net_forward.5} parent=11 // pred_fallthru
        _
      // Predicated region
      $region25: #{net_forward.5} parent=11 // pred_check
        %p369 = pneg %p130
      $region26: #{net_forward.5} parent=11 // pred_check_branch
        %371 = sbr.rel (%p369) target = $region28
      $region27: #{net_forward.5} parent=11 // pred_region
        _
      $region28: #{net_forward.5} parent=11 // pred_fallthru
        _
      // Predicated region
      $region29: #{net_forward.5} parent=11 // pred_check
        %p372 = pneg %p151
      $region30: #{net_forward.5} parent=11 // pred_check_branch
        %374 = sbr.rel (%p372) target = $region32
      $region31: #{net_forward.5} parent=11 // pred_region
        _
      $region32: #{net_forward.5} parent=11 // pred_fallthru
        _
      // Predicated region
      $region33: #{net_forward.5} parent=11 // pred_check
        %p375 = pneg %p172
      $region34: #{net_forward.5} parent=11 // pred_check_branch
        %377 = sbr.rel (%p375) target = $region36
      $region35: #{net_forward.5} parent=11 // pred_region
        _
      $region36: #{net_forward.5} parent=11 // pred_fallthru
        _
      // Predicated region
      $region37: #{net_forward.5} parent=11 // pred_check
        %p378 = pneg %p193
      $region38: #{net_forward.5} parent=11 // pred_check_branch
        %380 = sbr.rel (%p378) target = $region40
      $region39: #{net_forward.5} parent=11 // pred_region
        _
      $region40: #{net_forward.5} parent=11 // pred_fallthru
        _
      // Predicated region
      $region41: #{net_forward.5} parent=11 // pred_check
        %p381 = pneg %p214
      $region42: #{net_forward.5} parent=11 // pred_check_branch
        %383 = sbr.rel (%p381) target = $region44
      $region43: #{net_forward.5} parent=11 // pred_region
        _
      $region44: #{net_forward.5} parent=11 // pred_fallthru
        _
      // Predicated region
      $region45: #{net_forward.5} parent=11 // pred_check
        %p384 = pneg %p235
      $region46: #{net_forward.5} parent=11 // pred_check_branch
        %386 = sbr.rel (%p384) target = $region48
      $region47: #{net_forward.5} parent=11 // pred_region
        _
      $region48: #{net_forward.5} parent=11 // pred_fallthru
        _
      // Predicated region
      $region49: #{net_forward.5} parent=11 // pred_check
        %p387 = pneg %p256
      $region50: #{net_forward.5} parent=11 // pred_check_branch
        %389 = sbr.rel (%p387) target = $region52
      $region51: #{net_forward.5} parent=11 // pred_region
        _
      $region52: #{net_forward.5} parent=11 // pred_fallthru
        _
      // Predicated region
      $region53: #{net_forward.5} parent=11 // pred_check
        %p390 = pneg %p277
      $region54: #{net_forward.5} parent=11 // pred_check_branch
        %392 = sbr.rel (%p390) target = $region56
      $region55: #{net_forward.5} parent=11 // pred_region
        _
      $region56: #{net_forward.5} parent=11 // pred_fallthru
        _
      // Predicated region
      $region57: #{net_forward.5} parent=11 // pred_check
        %p393 = pneg %p298
      $region58: #{net_forward.5} parent=11 // pred_check_branch
        %395 = sbr.rel (%p393) target = $region60
      $region59: #{net_forward.5} parent=11 // pred_region
        _
      $region60: #{net_forward.5} parent=11 // pred_fallthru
        _
      // Predicated region
      $region61: #{net_forward.5} parent=11 // pred_check
        %p396 = pneg %p319
      $region62: #{net_forward.5} parent=11 // pred_check_branch
        %398 = sbr.rel (%p396) target = $region64
      $region63: #{net_forward.5} parent=11 // pred_region
        _
      $region64: #{net_forward.5} parent=11 // pred_fallthru
        _
    $region12: #{net_forward.5} parent=5 // pred_fallthru
      _
    %p399 = scmp.lt.s32.totalorder %s20, 2
    // Predicated region
    $region65: #{net_forward.5} parent=5 // pred_check
      %p400 = pneg %p399
    $region66: #{net_forward.5} parent=5 // pred_check_branch
      %402 = sbr.rel (%p400) target = $region68
    $region67: #{net_forward.5} parent=5 // pred_region
      // Predicated region
      $region69: #{net_forward.5} parent=67 // pred_check
        %p403 = pneg %p40
      $region70: #{net_forward.5} parent=67 // pred_check_branch
        %405 = sbr.rel (%p403) target = $region72
      $region71: #{net_forward.5} parent=67 // pred_region
        %p406 = scmp.lt.s32.totalorder %s20, 1
        %s407 = scalar_select %p406, %s20, 1
        %s408 = smul.addr %s407, 8
        %s409 = scalar_lea.vmem %s0, %s408
      $region72: #{net_forward.5} parent=67 // pred_fallthru
        _
    $region68: #{net_forward.5} parent=5 // pred_fallthru
      _
    %p410 = scmp.le.s32.totalorder 1, %s20
    %p411 = scmp.lt.s32.totalorder %s20, 3
    %p412 = pnand %p410, %p411
    %p413 = pneg %p412
    // Predicated region
    $region73: #{net_forward.5} parent=5 // pred_check
      _
    $region74: #{net_forward.5} parent=5 // pred_check_branch
      %415 = sbr.rel (%p412) target = $region76
    $region75: #{net_forward.5} parent=5 // pred_region
      %s416 = ssub.s32 %s20, 1
      %p417 = scmp.lt.s32.totalorder %s25, 1
      %s418 = scalar_select %p417, %s25, 1
      %s419 = smul.addr %s418, 8
      %s420 = scalar_lea.vmem %s0, %s419
      %p421 = pneg %p46
      %p422 = pneg %p43
      %p423 = pneg %p67
      %p424 = pneg %p64
      %p425 = pneg %p88
      %p426 = pneg %p85
      %p427 = pneg %p109
      %p428 = pneg %p106
      %p429 = pneg %p130
      %p430 = pneg %p127
      %p431 = pneg %p151
      %p432 = pneg %p148
      %p433 = pneg %p172
      %p434 = pneg %p169
      %p435 = pneg %p193
      %p436 = pneg %p190
      %p437 = pneg %p214
      %p438 = pneg %p211
      %p439 = pneg %p235
      %p440 = pneg %p232
      %p441 = pneg %p256
      %p442 = pneg %p253
      %p443 = pneg %p277
      %p444 = pneg %p274
      %p445 = pneg %p298
      %p446 = pneg %p295
      %p447 = pneg %p319
      %p448 = pneg %p316
      %p449 = pneg %p345
      %p450 = pneg %p342
      %p451 = scmp.lt.s32.totalorder %s25, 1
      %s452 = scalar_select %p451, %s25, 1
      %s453 = smul.addr %s452, 8
      %s454 = scalar_lea.vmem %s14, %s453
      %p455 = scmp.lt.s32.totalorder %s25, 1
      %s456 = scalar_select %p455, %s25, 1
      %s457 = smul.addr %s456, 8
      %s458 = scalar_lea.vmem %s0, %s457
      %p459 = scmp.lt.s32.totalorder %s25, 1
      %s460 = scalar_select %p459, %s25, 1
      %s461 = smul.addr %s460, 8
      %s462 = scalar_lea.vmem %s14, %s461
      %v464 = vld [vmem:[%s458] sm:$0xff]
      %v465 = vmul.f32 %v464, %v464
      %vm466 = vcmask 261120
      %v467 = vsel %vm466, %v465, 0.0
      %468 = vadd.xlane.f32.xlu0 %v467
      %v469 = vpop.xlane.xlu0 %468
      %v470 = vrcp.pop 32.0
      %v471 = vmul.f32 32.0, %v470
      %v472 = vsub.f32 1.0, %v471
      %v473 = vmul.f32 %v470, %v472
      %v474 = vadd.f32 %v470, %v473
      %vm475 = vweird.f32 %v470
      %v476 = vsel %vm475, %v470, %v474
      %v477 = vmul.f32 %v469, %v476
      %v478 = vadd.f32 %v477, 1e-05
      %v479 = vrsqrt.pop %v478
      %v480 = vmul.f32 %v479, %v478
      %v481 = vmul.f32 %v480, %v479
      %v482 = vmul.f32 0.5, %v481
      %v483 = vsub.f32 1.5, %v482
      %v484 = vmul.f32 %v479, %v483
      %vm485 = vweird.f32 %v478
      %vm486 = vweird.f32 %v479
      %vm487 = vmor %vm485, %vm486
      %v488 = vsel %vm487, %v479, %v484
      %v489 = vmul.f32 %v464, %v488
      %v490 = vld [vmem:[%s1] sm:$0x1]
      %v492 = vperm.slane %v490, 0
      %v494 = vmul.f32 %v489, %v492
      %v495 = vpack.c.bf16 %v494, %v494
      %v496 = vld [vmem:[%s2] sm:$0xf]
      %v497 = vld [vmem:[%s2 + $0x4] sm:$0xf]
      %v498 = vld [vmem:[%s2 + $0x8] sm:$0xf]
      %v499 = vld [vmem:[%s2 + $0xc] sm:$0xf]
      %v504 = vunpack.c.l.b16 %v496
      %v505 = vunpack.c.l.b16 %v497
      %v506 = vunpack.c.l.b16 %v498
      %v507 = vunpack.c.l.b16 %v499
      %v508 = vpack.c.b16 %v505, %v504
      %v509 = vpack.c.b16 %v507, %v506
      %v513 = vsel %vm466, %v495, 0
      %515 = vmatpush.bf16.msra.mxu0 0
      %516 = vmatpush.bf16.msra.mxu0 0
      %517 = vmatpush.bf16.msra.mxu0 0
      %518 = vmatpush.bf16.msra.mxu0 0
      %519 = vmatpush.bf16.msra.mxu0 0
      %520 = vmatpush.bf16.msra.mxu0 0
      %521 = vmatpush.bf16.msra.mxu0 %v509
      %522 = vmatpush.bf16.msra.mxu0 %v508
      %523 = vmatmul.bf16.gmra.mxu0 %v513
      %v524 = vpop.f32.mrf.mxu0
      %v525 = vadd.f32 0.0, %v524
      %v526 = vpop.f32.mrf.mxu0
      %527 = vdwg.mxu0
      %v528 = vld [vmem:[%s3] sm:$0xf]
      %v529 = vld [vmem:[%s3 + $0x4] sm:$0xf]
      %v530 = vld [vmem:[%s3 + $0x8] sm:$0xf]
      %v531 = vld [vmem:[%s3 + $0xc] sm:$0xf]
      %v536 = vunpack.c.l.b16 %v528
      %v537 = vunpack.c.l.b16 %v529
      %v538 = vunpack.c.l.b16 %v530
      %v539 = vunpack.c.l.b16 %v531
      %v540 = vpack.c.b16 %v537, %v536
      %v541 = vpack.c.b16 %v539, %v538
      %544 = vmatpush.bf16.msra.mxu0 0
      %545 = vmatpush.bf16.msra.mxu0 0
      %546 = vmatpush.bf16.msra.mxu0 0
      %547 = vmatpush.bf16.msra.mxu0 0
      %548 = vmatpush.bf16.msra.mxu0 0
      %549 = vmatpush.bf16.msra.mxu0 0
      %550 = vmatpush.bf16.msra.mxu0 %v541
      %551 = vmatpush.bf16.msra.mxu0 %v540
      %552 = vmatmul.bf16.gmra.mxu0 %v513
      %v553 = vpop.f32.mrf.mxu0
      %v554 = vadd.f32 0.0, %v553
      %v555 = vpop.f32.mrf.mxu0
      %556 = vdwg.mxu0
      %v557 = vld [vmem:[%s4] sm:$0xf]
      %v558 = vlaneseq
      %v559 = vshrl.u32 %v558, 7
      %v560 = vperm.slane %v557, 3
      %v561 = vmul.f32 %v525, %v560
      %v562 = vrot.slane %v525, 5
      %vm563 = vcmp.ge.s32.totalorder %v559, 3
      %v564 = vsel %vm563, 1, 0
      %vm565 = vcmp.eq.s32.totalorder %v564, 1
      %v566 = vsel %vm565, %v562, 0.0
      %v567 = vperm.slane %v557, 0
      %v568 = vmul.f32 %v566, %v567
      %v569 = vadd.f32 %v561, %v568
      %v570 = vrot.slane %v525, 6
      %vm571 = vcmp.ge.s32.totalorder %v559, 2
      %v572 = vsel %vm571, 1, 0
      %vm573 = vcmp.eq.s32.totalorder %v572, 1
      %v574 = vsel %vm573, %v570, 0.0
      %v575 = vperm.slane %v557, 1
      %v576 = vmul.f32 %v574, %v575
      %v577 = vadd.f32 %v569, %v576
      %v578 = vrot.slane %v525, 7
      %vm579 = vcmp.ge.s32.totalorder %v559, 1
      %v580 = vsel %vm579, 1, 0
      %vm581 = vcmp.eq.s32.totalorder %v580, 1
      %v582 = vsel %vm581, %v578, 0.0
      %v583 = vperm.slane %v557, 2
      %v584 = vmul.f32 %v582, %v583
      %v585 = vadd.f32 %v577, %v584
      %v586 = vld [vmem:[%s5] sm:$0x1]
      %v588 = vperm.slane %v586, 0
      %v590 = vadd.f32 %v585, %v588
      %v591 = vxor.u32 %v590, 2147483648
      %v592 = vmul.f32 %v591, 1.442695
      %v593 = vpow.pop %v592
      %v594 = vadd.f32 %v593, 1.0
      %v595 = vrcp.pop %v594
      %v596 = vmul.f32 %v594, %v595
      %v597 = vsub.f32 1.0, %v596
      %v598 = vmul.f32 %v595, %v597
      %v599 = vadd.f32 %v595, %v598
      %vm600 = vweird.f32 %v594
      %vm601 = vweird.f32 %v595
      %vm602 = vmor %vm600, %vm601
      %v603 = vsel %vm602, %v595, %v599
      %v604 = vand.u32 2147483647, %v594
      %vm605 = vcmp.eq.f32.partialorder %v604, 8.507059e+37
      %v606 = vand.u32 %v594, 2147483648
      %v607 = vor.u32 1.1754944e-38, %v606
      %v608 = vsel %vm605, %v607, %v603
      %v609 = vmul.f32 1.0, %v608
      %v610 = vmul.f32 %v590, %v609
      %v611 = vpack.c.bf16 %v610, %v610
      %v612 = vld [vmem:[%s6] sm:$0xf]
      %v613 = vld [vmem:[%s6 + $0x4] sm:$0xf]
      %v614 = vld [vmem:[%s6 + $0x8] sm:$0xf]
      %v615 = vld [vmem:[%s6 + $0xc] sm:$0xf]
      %v616 = vld [vmem:[%s6 + $0x10] sm:$0xf]
      %v617 = vld [vmem:[%s6 + $0x14] sm:$0xf]
      %v618 = vld [vmem:[%s6 + $0x18] sm:$0xf]
      %v619 = vld [vmem:[%s6 + $0x1c] sm:$0xf]
      %v628 = vunpack.c.l.b16 %v612
      %v629 = vunpack.c.l.b16 %v613
      %v630 = vunpack.c.l.b16 %v614
      %v631 = vunpack.c.l.b16 %v615
      %v632 = vunpack.c.l.b16 %v616
      %v633 = vunpack.c.l.b16 %v617
      %v634 = vunpack.c.l.b16 %v618
      %v635 = vunpack.c.l.b16 %v619
      %v636 = vpack.c.b16 %v629, %v628
      %v637 = vpack.c.b16 %v631, %v630
      %v638 = vpack.c.b16 %v633, %v632
      %v639 = vpack.c.b16 %v635, %v634
      %vm644 = vcmask 523264
      %v646 = vsel %vm644, %v611, 0
      %648 = vmatpush.bf16.msra.mxu0 0
      %649 = vmatpush.bf16.msra.mxu0 0
      %650 = vmatpush.bf16.msra.mxu0 0
      %651 = vmatpush.bf16.msra.mxu0 0
      %652 = vmatpush.bf16.msra.mxu0 %v639
      %653 = vmatpush.bf16.msra.mxu0 %v638
      %654 = vmatpush.bf16.msra.mxu0 %v637
      %655 = vmatpush.bf16.msra.mxu0 %v636
      %656 = vmatmul.bf16.gmra.mxu0 %v646
      %v657 = vpop.f32.mrf.mxu0
      %v658 = vadd.f32 0.0, %v657
      %v659 = vpop.f32.mrf.mxu0
      %660 = vdwg.mxu0
      %v661 = vld [vmem:[%s7] sm:$0xf]
      %v662 = vld [vmem:[%s7 + $0x4] sm:$0xf]
      %v663 = vld [vmem:[%s7 + $0x8] sm:$0xf]
      %v664 = vld [vmem:[%s7 + $0xc] sm:$0xf]
      %v665 = vld [vmem:[%s7 + $0x10] sm:$0xf]
      %v666 = vld [vmem:[%s7 + $0x14] sm:$0xf]
      %v667 = vld [vmem:[%s7 + $0x18] sm:$0xf]
      %v668 = vld [vmem:[%s7 + $0x1c] sm:$0xf]
      %v677 = vunpack.c.l.b16 %v661
      %v678 = vunpack.c.l.b16 %v662
      %v679 = vunpack.c.l.b16 %v663
      %v680 = vunpack.c.l.b16 %v664
      %v681 = vunpack.c.l.b16 %v665
      %v682 = vunpack.c.l.b16 %v666
      %v683 = vunpack.c.l.b16 %v667
      %v684 = vunpack.c.l.b16 %v668
      %v685 = vpack.c.b16 %v678, %v677
      %v686 = vpack.c.b16 %v680, %v679
      %v687 = vpack.c.b16 %v682, %v681
      %v688 = vpack.c.b16 %v684, %v683
      %693 = vmatpush.bf16.msra.mxu0 0
      %694 = vmatpush.bf16.msra.mxu0 0
      %695 = vmatpush.bf16.msra.mxu0 0
      %696 = vmatpush.bf16.msra.mxu0 0
      %697 = vmatpush.bf16.msra.mxu0 %v688
      %698 = vmatpush.bf16.msra.mxu0 %v687
      %699 = vmatpush.bf16.msra.mxu0 %v686
      %700 = vmatpush.bf16.msra.mxu0 %v685
      %701 = vmatmul.bf16.gmra.mxu0 %v646
      %v702 = vpop.f32.mrf.mxu0
      %v703 = vadd.f32 0.0, %v702
      %v704 = vpop.f32.mrf.mxu0
      %705 = vdwg.mxu0
      %vm706 = vcmask 130048
      %707 = vst.msk [vmem:[#allocation4] sm:$0xff] %vm706, %v703
      %v708 = vld [vmem:[%s8] sm:$0xf]
      %v709 = vld [vmem:[%s8 + $0x4] sm:$0xf]
      %v710 = vld [vmem:[%s8 + $0x8] sm:$0xf]
      %v711 = vld [vmem:[%s8 + $0xc] sm:$0xf]
      %v712 = vld [vmem:[%s8 + $0x10] sm:$0xf]
      %v713 = vld [vmem:[%s8 + $0x14] sm:$0xf]
      %v714 = vld [vmem:[%s8 + $0x18] sm:$0xf]
      %v715 = vld [vmem:[%s8 + $0x1c] sm:$0xf]
      %v724 = vunpack.c.l.b16 %v708
      %v725 = vunpack.c.l.b16 %v709
      %v726 = vunpack.c.l.b16 %v710
      %v727 = vunpack.c.l.b16 %v711
      %v728 = vunpack.c.l.b16 %v712
      %v729 = vunpack.c.l.b16 %v713
      %v730 = vunpack.c.l.b16 %v714
      %v731 = vunpack.c.l.b16 %v715
      %v732 = vpack.c.b16 %v725, %v724
      %v733 = vpack.c.b16 %v727, %v726
      %v734 = vpack.c.b16 %v729, %v728
      %v735 = vpack.c.b16 %v731, %v730
      %740 = vmatpush.bf16.msra.mxu0 0
      %741 = vmatpush.bf16.msra.mxu0 0
      %742 = vmatpush.bf16.msra.mxu0 0
      %743 = vmatpush.bf16.msra.mxu0 0
      %744 = vmatpush.bf16.msra.mxu0 %v735
      %745 = vmatpush.bf16.msra.mxu0 %v734
      %746 = vmatpush.bf16.msra.mxu0 %v733
      %747 = vmatpush.bf16.msra.mxu0 %v732
      %748 = vmatmul.bf16.gmra.mxu0 %v646
      %v749 = vpop.f32.mrf.mxu0
      %v750 = vadd.f32 0.0, %v749
      %v751 = vpop.f32.mrf.mxu0
      %752 = vdwg.mxu0
      %753 = vst.msk [vmem:[#allocation5] sm:$0xff] %vm706, %v750
      %v754 = vpack.c.bf16 %v658, %v658
      %v755 = vld [vmem:[%s9] sm:$0x1]
      %v756 = vld [vmem:[%s10] sm:$0x1]
      %v758 = vperm.slane %v756, 0
      %vm760 = vcmask 15360
      %v762 = vsel %vm760, %v754, 0
      %vm764 = vcmask 1040384
      %v766 = vsel %vm764, %v755, 0
      %768 = vmatpush.bf16.msra.mxu0 0
      %769 = vmatpush.bf16.msra.mxu0 0
      %770 = vmatpush.bf16.msra.mxu0 0
      %771 = vmatpush.bf16.msra.mxu0 0
      %772 = vmatpush.bf16.msra.mxu0 0
      %773 = vmatpush.bf16.msra.mxu0 0
      %774 = vmatpush.bf16.msra.mxu0 0
      %775 = vmatpush.bf16.msra.mxu0 %v766
      %776 = vmatmul.bf16.gmra.mxu0 %v762
      %v777 = vpop.f32.mrf.mxu0
      %v778 = vadd.f32 %v758, %v777
      %v779 = vpop.f32.mrf.mxu0
      %780 = vdwg.mxu0
      %v781 = vmin.f32 %v778, 20.0
      %vm782 = vcmp.gt.f32.partialorder %v778, 20.0
      %v783 = vmul.f32 %v781, 1.442695
      %v784 = vpow.pop %v783
      %v785 = vadd.f32 %v784, 1.0
      %v786 = vlog2.pop %v785
      %v787 = vmul.f32 %v786, 0.6931472
      %v788 = vmul.f32 -0.5, %v784
      %v789 = vadd.f32 %v788, 1.0
      %v790 = vmul.f32 %v789, %v784
      %v791 = vand.u32 2147483647, %v784
      %vm792 = vcmp.lt.f32.partialorder %v791, 0.0004427343
      %v793 = vsel %vm792, %v790, %v787
      %v794 = vsel %vm782, %v778, %v793
      %795 = vst.msk [vmem:[#allocation2] sm:$0xff] %vm644, %v794
      %v796 = vmul.f32 %v794, %v610
      %797 = vst.msk [vmem:[#allocation3] sm:$0xff] %vm644, %v796
      %v798 = vld [vmem:[%s11] sm:$0xff]
      %v799 = vld [vmem:[%s11 + $0x8] sm:$0xff]
      %v800 = vmul.f32 %v798, 1.442695
      %v801 = vpow.pop %v800
      %v802 = vmul.f32 %v799, 1.442695
      %v803 = vpow.pop %v802
      %v804 = vsub.f32 0.0, %v801
      %v805 = vsub.f32 0.0, %v803
      %v806 = vld [vmem:[#allocation2] sm:$0xff]
      %v807 = vld [vmem:[#allocation3] sm:$0xff]
      %v808 = vld [vmem:[#allocation4] sm:$0xff]
      %v809 = vld [vmem:[#allocation5] sm:$0xff]
      %v811 = vrot.slane %v806, 1
      %v812 = vrot.slane %v806, 2
      %v813 = vrot.slane %v806, 3
      %v814 = vrot.slane %v806, 4
      %v815 = vrot.slane %v806, 5
      %v816 = vrot.slane %v806, 6
      %v817 = vrot.slane %v806, 7
      %v818 = vperm.slane %v806, 0
      %v819 = vperm.slane %v811, 0
      %v820 = vperm.slane %v812, 0
      %v821 = vperm.slane %v813, 0
      %v822 = vperm.slane %v814, 0
      %v823 = vperm.slane %v815, 0
      %v824 = vperm.slane %v816, 0
      %v825 = vperm.slane %v817, 0
      %v834 = vmul.f32 %v818, %v804
      %v835 = vmul.f32 %v818, %v805
      %v836 = vmul.f32 %v819, %v804
      %v837 = vmul.f32 %v819, %v805
      %v838 = vmul.f32 %v820, %v804
      %v839 = vmul.f32 %v820, %v805
      %v840 = vmul.f32 %v821, %v804
      %v841 = vmul.f32 %v821, %v805
      %v842 = vmul.f32 %v822, %v804
      %v843 = vmul.f32 %v822, %v805
      %v844 = vmul.f32 %v823, %v804
      %v845 = vmul.f32 %v823, %v805
      %v846 = vmul.f32 %v824, %v804
      %v847 = vmul.f32 %v824, %v805
      %v848 = vmul.f32 %v825, %v804
      %v849 = vmul.f32 %v825, %v805
      %v850 = vmul.f32 %v834, 1.442695
      %v851 = vpow.pop %v850
      %v852 = vmul.f32 %v835, 1.442695
      %v853 = vpow.pop %v852
      %v854 = vmul.f32 %v836, 1.442695
      %v855 = vpow.pop %v854
      %v856 = vmul.f32 %v837, 1.442695
      %v857 = vpow.pop %v856
      %v858 = vmul.f32 %v838, 1.442695
      %v859 = vpow.pop %v858
      %v860 = vmul.f32 %v839, 1.442695
      %v861 = vpow.pop %v860
      %v862 = vmul.f32 %v840, 1.442695
      %v863 = vpow.pop %v862
      %v864 = vmul.f32 %v841, 1.442695
      %v865 = vpow.pop %v864
      %v866 = vmul.f32 %v842, 1.442695
      %v867 = vpow.pop %v866
      %v868 = vmul.f32 %v843, 1.442695
      %v869 = vpow.pop %v868
      %v870 = vmul.f32 %v844, 1.442695
      %v871 = vpow.pop %v870
      %v872 = vmul.f32 %v845, 1.442695
      %v873 = vpow.pop %v872
      %v874 = vmul.f32 %v846, 1.442695
      %v875 = vpow.pop %v874
      %v876 = vmul.f32 %v847, 1.442695
      %v877 = vpow.pop %v876
      %v878 = vmul.f32 %v848, 1.442695
      %v879 = vpow.pop %v878
      %v880 = vmul.f32 %v849, 1.442695
      %v881 = vpow.pop %v880
      %882 = vst.msk [vmem:[#allocation6] sm:$0xff] %vm644, %v851
      %883 = vst.msk [vmem:[#allocation6 + $0x8] sm:$0xff] %vm644, %v853
      %884 = vst.msk [vmem:[#allocation6 + $0x10] sm:$0xff] %vm644, %v855
      %885 = vst.msk [vmem:[#allocation6 + $0x18] sm:$0xff] %vm644, %v857
      %886 = vst.msk [vmem:[#allocation6 + $0x20] sm:$0xff] %vm644, %v859
      %887 = vst.msk [vmem:[#allocation6 + $0x28] sm:$0xff] %vm644, %v861
      %888 = vst.msk [vmem:[#allocation6 + $0x30] sm:$0xff] %vm644, %v863
      %889 = vst.msk [vmem:[#allocation6 + $0x38] sm:$0xff] %vm644, %v865
      %890 = vst.msk [vmem:[#allocation6 + $0x40] sm:$0xff] %vm644, %v867
      %891 = vst.msk [vmem:[#allocation6 + $0x48] sm:$0xff] %vm644, %v869
      %892 = vst.msk [vmem:[#allocation6 + $0x50] sm:$0xff] %vm644, %v871
      %893 = vst.msk [vmem:[#allocation6 + $0x58] sm:$0xff] %vm644, %v873
      %894 = vst.msk [vmem:[#allocation6 + $0x60] sm:$0xff] %vm644, %v875
      %895 = vst.msk [vmem:[#allocation6 + $0x68] sm:$0xff] %vm644, %v877
      %896 = vst.msk [vmem:[#allocation6 + $0x70] sm:$0xff] %vm644, %v879
      %897 = vst.msk [vmem:[#allocation6 + $0x78] sm:$0xff] %vm644, %v881
      %v899 = vrot.slane %v807, 1
      %v900 = vrot.slane %v807, 2
      %v901 = vrot.slane %v807, 3
      %v902 = vrot.slane %v807, 4
      %v903 = vrot.slane %v807, 5
      %v904 = vrot.slane %v807, 6
      %v905 = vrot.slane %v807, 7
      %v906 = vperm.slane %v808, 0
      %v907 = vlaneseq
      %v908 = vshrl.u32 %v907, 7
      %910 = vset.pattern.permute.xlu0 %v908
      %911 = vperm.xlu0 %910, %v906
      %v912 = vpop.permute.xlu0 %911
      %v913 = vlaneseq
      %v914 = vshrl.u32 %v913, 7
      %v915 = vadd.s32 %v914, 8
      %916 = vset.pattern.permute.xlu0 %v915
      %917 = vperm.xlu0 %916, %v906
      %v918 = vpop.permute.xlu0 %917
      %v919 = vperm.slane %v808, 1
      %v920 = vlaneseq
      %v921 = vshrl.u32 %v920, 7
      %923 = vset.pattern.permute.xlu0 %v921
      %924 = vperm.xlu0 %923, %v919
      %v925 = vpop.permute.xlu0 %924
      %v926 = vlaneseq
      %v927 = vshrl.u32 %v926, 7
      %v928 = vadd.s32 %v927, 8
      %929 = vset.pattern.permute.xlu0 %v928
      %930 = vperm.xlu0 %929, %v919
      %v931 = vpop.permute.xlu0 %930
      %v932 = vperm.slane %v808, 2
      %v933 = vlaneseq
      %v934 = vshrl.u32 %v933, 7
      %936 = vset.pattern.permute.xlu0 %v934
      %937 = vperm.xlu0 %936, %v932
      %v938 = vpop.permute.xlu0 %937
      %v939 = vlaneseq
      %v940 = vshrl.u32 %v939, 7
      %v941 = vadd.s32 %v940, 8
      %942 = vset.pattern.permute.xlu0 %v941
      %943 = vperm.xlu0 %942, %v932
      %v944 = vpop.permute.xlu0 %943
      %v945 = vperm.slane %v808, 3
      %v946 = vlaneseq
      %v947 = vshrl.u32 %v946, 7
      %949 = vset.pattern.permute.xlu0 %v947
      %950 = vperm.xlu0 %949, %v945
      %v951 = vpop.permute.xlu0 %950
      %v952 = vlaneseq
      %v953 = vshrl.u32 %v952, 7
      %v954 = vadd.s32 %v953, 8
      %955 = vset.pattern.permute.xlu0 %v954
      %956 = vperm.xlu0 %955, %v945
      %v957 = vpop.permute.xlu0 %956
      %v958 = vperm.slane %v808, 4
      %v959 = vlaneseq
      %v960 = vshrl.u32 %v959, 7
      %962 = vset.pattern.permute.xlu0 %v960
      %963 = vperm.xlu0 %962, %v958
      %v964 = vpop.permute.xlu0 %963
      %v965 = vlaneseq
      %v966 = vshrl.u32 %v965, 7
      %v967 = vadd.s32 %v966, 8
      %968 = vset.pattern.permute.xlu0 %v967
      %969 = vperm.xlu0 %968, %v958
      %v970 = vpop.permute.xlu0 %969
      %v971 = vperm.slane %v808, 5
      %v972 = vlaneseq
      %v973 = vshrl.u32 %v972, 7
      %975 = vset.pattern.permute.xlu0 %v973
      %976 = vperm.xlu0 %975, %v971
      %v977 = vpop.permute.xlu0 %976
      %v978 = vlaneseq
      %v979 = vshrl.u32 %v978, 7
      %v980 = vadd.s32 %v979, 8
      %981 = vset.pattern.permute.xlu0 %v980
      %982 = vperm.xlu0 %981, %v971
      %v983 = vpop.permute.xlu0 %982
      %v984 = vperm.slane %v808, 6
      %v985 = vlaneseq
      %v986 = vshrl.u32 %v985, 7
      %988 = vset.pattern.permute.xlu0 %v986
      %989 = vperm.xlu0 %988, %v984
      %v990 = vpop.permute.xlu0 %989
      %v991 = vlaneseq
      %v992 = vshrl.u32 %v991, 7
      %v993 = vadd.s32 %v992, 8
      %994 = vset.pattern.permute.xlu0 %v993
      %995 = vperm.xlu0 %994, %v984
      %v996 = vpop.permute.xlu0 %995
      %v997 = vperm.slane %v808, 7
      %v998 = vlaneseq
      %v999 = vshrl.u32 %v998, 7
      %1001 = vset.pattern.permute.xlu0 %v999
      %1002 = vperm.xlu0 %1001, %v997
      %v1003 = vpop.permute.xlu0 %1002
      %v1004 = vlaneseq
      %v1005 = vshrl.u32 %v1004, 7
      %v1006 = vadd.s32 %v1005, 8
      %1007 = vset.pattern.permute.xlu0 %v1006
      %1008 = vperm.xlu0 %1007, %v997
      %v1009 = vpop.permute.xlu0 %1008
      %v1010 = vperm.slane %v807, 0
      %v1011 = vperm.slane %v899, 0
      %v1012 = vperm.slane %v900, 0
      %v1013 = vperm.slane %v901, 0
      %v1014 = vperm.slane %v902, 0
      %v1015 = vperm.slane %v903, 0
      %v1016 = vperm.slane %v904, 0
      %v1017 = vperm.slane %v905, 0
      %v1026 = vmul.f32 %v1010, %v912
      %v1027 = vmul.f32 %v1010, %v918
      %v1028 = vmul.f32 %v1011, %v925
      %v1029 = vmul.f32 %v1011, %v931
      %v1030 = vmul.f32 %v1012, %v938
      %v1031 = vmul.f32 %v1012, %v944
      %v1032 = vmul.f32 %v1013, %v951
      %v1033 = vmul.f32 %v1013, %v957
      %v1034 = vmul.f32 %v1014, %v964
      %v1035 = vmul.f32 %v1014, %v970
      %v1036 = vmul.f32 %v1015, %v977
      %v1037 = vmul.f32 %v1015, %v983
      %v1038 = vmul.f32 %v1016, %v990
      %v1039 = vmul.f32 %v1016, %v996
      %v1040 = vmul.f32 %v1017, %v1003
      %v1041 = vmul.f32 %v1017, %v1009
      %1042 = vst.msk [vmem:[#allocation7] sm:$0xff] %vm644, %v1026
      %1043 = vst.msk [vmem:[#allocation7 + $0x8] sm:$0xff] %vm644, %v1027
      %1044 = vst.msk [vmem:[#allocation7 + $0x10] sm:$0xff] %vm644, %v1028
      %1045 = vst.msk [vmem:[#allocation7 + $0x18] sm:$0xff] %vm644, %v1029
      %1046 = vst.msk [vmem:[#allocation7 + $0x20] sm:$0xff] %vm644, %v1030
      %1047 = vst.msk [vmem:[#allocation7 + $0x28] sm:$0xff] %vm644, %v1031
      %1048 = vst.msk [vmem:[#allocation7 + $0x30] sm:$0xff] %vm644, %v1032
      %1049 = vst.msk [vmem:[#allocation7 + $0x38] sm:$0xff] %vm644, %v1033
      %1050 = vst.msk [vmem:[#allocation7 + $0x40] sm:$0xff] %vm644, %v1034
      %1051 = vst.msk [vmem:[#allocation7 + $0x48] sm:$0xff] %vm644, %v1035
      %1052 = vst.msk [vmem:[#allocation7 + $0x50] sm:$0xff] %vm644, %v1036
      %1053 = vst.msk [vmem:[#allocation7 + $0x58] sm:$0xff] %vm644, %v1037
      %1054 = vst.msk [vmem:[#allocation7 + $0x60] sm:$0xff] %vm644, %v1038
      %1055 = vst.msk [vmem:[#allocation7 + $0x68] sm:$0xff] %vm644, %v1039
      %1056 = vst.msk [vmem:[#allocation7 + $0x70] sm:$0xff] %vm644, %v1040
      %1057 = vst.msk [vmem:[#allocation7 + $0x78] sm:$0xff] %vm644, %v1041
      loop: start=0, step=1, limit=8
      $region77: #{net_forward.5} parent=75 // loop_pre_header
        _
      $region78: #{net_forward.5} parent=75 // loop_header
        %s1059 = sphi 0, %s1063
        %p1060 = scmp.ge.s32.totalorder %s1059, 8
        %v1064 = vphi 0.0, %v1075
        %v1065 = vphi 0.0, %v1076
      $region79: #{net_forward.5} parent=75 // loop_header_branch
        %1062 = sbr.rel (%p1060) target = $region83
      $region80: #{net_forward.5} parent=75 // loop_body
        %s1066 = smul.u32 %s1059, 16
        %s1067 = scalar_lea.vmem [#allocation6], %s1066
        %v1068 = vld [vmem:[%s1067] sm:$0xff]
        %v1069 = vld [vmem:[%s1067 + $0x8] sm:$0xff]
        %v1070 = vmul.f32 %v1068, %v1064
        %v1071 = vmul.f32 %v1069, %v1065
        %s1072 = scalar_lea.vmem [#allocation7], %s1066
        %v1073 = vld [vmem:[%s1072] sm:$0xff]
        %v1074 = vld [vmem:[%s1072 + $0x8] sm:$0xff]
        %v1075 = vadd.f32 %v1070, %v1073
        %v1076 = vadd.f32 %v1071, %v1074
        %s1077 = scalar_lea.vmem [#allocation8], %s1066
        %1078 = vst.msk [vmem:[%s1077] sm:$0xff] %vm644, %v1075
        %1079 = vst.msk [vmem:[%s1077 + $0x8] sm:$0xff] %vm644, %v1076
      $region81: #{net_forward.5} parent=75 // loop_footer
        %s1063 = sadd.s32 1, %s1059
      $region82: #{net_forward.5} parent=75 // loop_footer_branch
        %1058 = sbr.rel target = $region78
      $region83: #{net_forward.5} parent=75 // loop_exit
        _
      %v1080 = vld [vmem:[#allocation8] sm:$0xff]
      %v1081 = vld [vmem:[#allocation8 + $0x8] sm:$0xff]
      %v1082 = vld [vmem:[#allocation8 + $0x10] sm:$0xff]
      %v1083 = vld [vmem:[#allocation8 + $0x18] sm:$0xff]
      %v1084 = vld [vmem:[#allocation8 + $0x20] sm:$0xff]
      %v1085 = vld [vmem:[#allocation8 + $0x28] sm:$0xff]
      %v1086 = vld [vmem:[#allocation8 + $0x30] sm:$0xff]
      %v1087 = vld [vmem:[#allocation8 + $0x38] sm:$0xff]
      %v1088 = vld [vmem:[#allocation8 + $0x40] sm:$0xff]
      %v1089 = vld [vmem:[#allocation8 + $0x48] sm:$0xff]
      %v1090 = vld [vmem:[#allocation8 + $0x50] sm:$0xff]
      %v1091 = vld [vmem:[#allocation8 + $0x58] sm:$0xff]
      %v1092 = vld [vmem:[#allocation8 + $0x60] sm:$0xff]
      %v1093 = vld [vmem:[#allocation8 + $0x68] sm:$0xff]
      %v1094 = vld [vmem:[#allocation8 + $0x70] sm:$0xff]
      %v1095 = vld [vmem:[#allocation8 + $0x78] sm:$0xff]
      %v1096 = vperm.slane %v809, 0
      %v1097 = vlaneseq
      %v1098 = vshrl.u32 %v1097, 7
      %1100 = vset.pattern.permute.xlu0 %v1098
      %1101 = vperm.xlu0 %1100, %v1096
      %v1102 = vpop.permute.xlu0 %1101
      %v1103 = vlaneseq
      %v1104 = vshrl.u32 %v1103, 7
      %v1105 = vadd.s32 %v1104, 8
      %1106 = vset.pattern.permute.xlu0 %v1105
      %1107 = vperm.xlu0 %1106, %v1096
      %v1108 = vpop.permute.xlu0 %1107
      %v1109 = vperm.slane %v809, 1
      %v1110 = vlaneseq
      %v1111 = vshrl.u32 %v1110, 7
      %1113 = vset.pattern.permute.xlu0 %v1111
      %1114 = vperm.xlu0 %1113, %v1109
      %v1115 = vpop.permute.xlu0 %1114
      %v1116 = vlaneseq
      %v1117 = vshrl.u32 %v1116, 7
      %v1118 = vadd.s32 %v1117, 8
      %1119 = vset.pattern.permute.xlu0 %v1118
      %1120 = vperm.xlu0 %1119, %v1109
      %v1121 = vpop.permute.xlu0 %1120
      %v1122 = vperm.slane %v809, 2
      %v1123 = vlaneseq
      %v1124 = vshrl.u32 %v1123, 7
      %1126 = vset.pattern.permute.xlu0 %v1124
      %1127 = vperm.xlu0 %1126, %v1122
      %v1128 = vpop.permute.xlu0 %1127
      %v1129 = vlaneseq
      %v1130 = vshrl.u32 %v1129, 7
      %v1131 = vadd.s32 %v1130, 8
      %1132 = vset.pattern.permute.xlu0 %v1131
      %1133 = vperm.xlu0 %1132, %v1122
      %v1134 = vpop.permute.xlu0 %1133
      %v1135 = vperm.slane %v809, 3
      %v1136 = vlaneseq
      %v1137 = vshrl.u32 %v1136, 7
      %1139 = vset.pattern.permute.xlu0 %v1137
      %1140 = vperm.xlu0 %1139, %v1135
      %v1141 = vpop.permute.xlu0 %1140
      %v1142 = vlaneseq
      %v1143 = vshrl.u32 %v1142, 7
      %v1144 = vadd.s32 %v1143, 8
      %1145 = vset.pattern.permute.xlu0 %v1144
      %1146 = vperm.xlu0 %1145, %v1135
      %v1147 = vpop.permute.xlu0 %1146
      %v1148 = vperm.slane %v809, 4
      %v1149 = vlaneseq
      %v1150 = vshrl.u32 %v1149, 7
      %1152 = vset.pattern.permute.xlu0 %v1150
      %1153 = vperm.xlu0 %1152, %v1148
      %v1154 = vpop.permute.xlu0 %1153
      %v1155 = vlaneseq
      %v1156 = vshrl.u32 %v1155, 7
      %v1157 = vadd.s32 %v1156, 8
      %1158 = vset.pattern.permute.xlu0 %v1157
      %1159 = vperm.xlu0 %1158, %v1148
      %v1160 = vpop.permute.xlu0 %1159
      %v1161 = vperm.slane %v809, 5
      %v1162 = vlaneseq
      %v1163 = vshrl.u32 %v1162, 7
      %1165 = vset.pattern.permute.xlu0 %v1163
      %1166 = vperm.xlu0 %1165, %v1161
      %v1167 = vpop.permute.xlu0 %1166
      %v1168 = vlaneseq
      %v1169 = vshrl.u32 %v1168, 7
      %v1170 = vadd.s32 %v1169, 8
      %1171 = vset.pattern.permute.xlu0 %v1170
      %1172 = vperm.xlu0 %1171, %v1161
      %v1173 = vpop.permute.xlu0 %1172
      %v1174 = vperm.slane %v809, 6
      %v1175 = vlaneseq
      %v1176 = vshrl.u32 %v1175, 7
      %1178 = vset.pattern.permute.xlu0 %v1176
      %1179 = vperm.xlu0 %1178, %v1174
      %v1180 = vpop.permute.xlu0 %1179
      %v1181 = vlaneseq
      %v1182 = vshrl.u32 %v1181, 7
      %v1183 = vadd.s32 %v1182, 8
      %1184 = vset.pattern.permute.xlu0 %v1183
      %1185 = vperm.xlu0 %1184, %v1174
      %v1186 = vpop.permute.xlu0 %1185
      %v1187 = vperm.slane %v809, 7
      %v1188 = vlaneseq
      %v1189 = vshrl.u32 %v1188, 7
      %1191 = vset.pattern.permute.xlu0 %v1189
      %1192 = vperm.xlu0 %1191, %v1187
      %v1193 = vpop.permute.xlu0 %1192
      %v1194 = vlaneseq
      %v1195 = vshrl.u32 %v1194, 7
      %v1196 = vadd.s32 %v1195, 8
      %1197 = vset.pattern.permute.xlu0 %v1196
      %1198 = vperm.xlu0 %1197, %v1187
      %v1199 = vpop.permute.xlu0 %1198
      %v1200 = vmul.f32 %v1080, %v1102
      %v1201 = vmul.f32 %v1081, %v1108
      %v1202 = vmul.f32 %v1082, %v1115
      %v1203 = vmul.f32 %v1083, %v1121
      %v1204 = vmul.f32 %v1084, %v1128
      %v1205 = vmul.f32 %v1085, %v1134
      %v1206 = vmul.f32 %v1086, %v1141
      %v1207 = vmul.f32 %v1087, %v1147
      %v1208 = vmul.f32 %v1088, %v1154
      %v1209 = vmul.f32 %v1089, %v1160
      %v1210 = vmul.f32 %v1090, %v1167
      %v1211 = vmul.f32 %v1091, %v1173
      %v1212 = vmul.f32 %v1092, %v1180
      %v1213 = vmul.f32 %v1093, %v1186
      %v1214 = vmul.f32 %v1094, %v1193
      %v1215 = vmul.f32 %v1095, %v1199
      %v1216 = vsel %vm644, %v1200, 0.0
      %v1217 = vsel %vm644, %v1201, 0.0
      %v1218 = vadd.f32 %v1216, %v1217
      %v1219 = vrot.slane %v1218, 4
      %v1220 = vadd.f32 %v1218, %v1219
      %v1221 = vrot.slane %v1220, 2
      %v1222 = vadd.f32 %v1220, %v1221
      %v1223 = vrot.slane %v1222, 1
      %v1224 = vadd.f32 %v1222, %v1223
      %v1225 = vsel %vm644, %v1202, 0.0
      %v1226 = vsel %vm644, %v1203, 0.0
      %v1227 = vadd.f32 %v1225, %v1226
      %v1228 = vrot.slane %v1227, 4
      %v1229 = vadd.f32 %v1227, %v1228
      %v1230 = vrot.slane %v1229, 2
      %v1231 = vadd.f32 %v1229, %v1230
      %v1232 = vrot.slane %v1231, 1
      %v1233 = vadd.f32 %v1231, %v1232
      %v1234 = vsel %vm644, %v1204, 0.0
      %v1235 = vsel %vm644, %v1205, 0.0
      %v1236 = vadd.f32 %v1234, %v1235
      %v1237 = vrot.slane %v1236, 4
      %v1238 = vadd.f32 %v1236, %v1237
      %v1239 = vrot.slane %v1238, 2
      %v1240 = vadd.f32 %v1238, %v1239
      %v1241 = vrot.slane %v1240, 1
      %v1242 = vadd.f32 %v1240, %v1241
      %v1243 = vsel %vm644, %v1206, 0.0
      %v1244 = vsel %vm644, %v1207, 0.0
      %v1245 = vadd.f32 %v1243, %v1244
      %v1246 = vrot.slane %v1245, 4
      %v1247 = vadd.f32 %v1245, %v1246
      %v1248 = vrot.slane %v1247, 2
      %v1249 = vadd.f32 %v1247, %v1248
      %v1250 = vrot.slane %v1249, 1
      %v1251 = vadd.f32 %v1249, %v1250
      %v1252 = vsel %vm644, %v1208, 0.0
      %v1253 = vsel %vm644, %v1209, 0.0
      %v1254 = vadd.f32 %v1252, %v1253
      %v1255 = vrot.slane %v1254, 4
      %v1256 = vadd.f32 %v1254, %v1255
      %v1257 = vrot.slane %v1256, 2
      %v1258 = vadd.f32 %v1256, %v1257
      %v1259 = vrot.slane %v1258, 1
      %v1260 = vadd.f32 %v1258, %v1259
      %v1261 = vsel %vm644, %v1210, 0.0
      %v1262 = vsel %vm644, %v1211, 0.0
      %v1263 = vadd.f32 %v1261, %v1262
      %v1264 = vrot.slane %v1263, 4
      %v1265 = vadd.f32 %v1263, %v1264
      %v1266 = vrot.slane %v1265, 2
      %v1267 = vadd.f32 %v1265, %v1266
      %v1268 = vrot.slane %v1267, 1
      %v1269 = vadd.f32 %v1267, %v1268
      %v1270 = vsel %vm644, %v1212, 0.0
      %v1271 = vsel %vm644, %v1213, 0.0
      %v1272 = vadd.f32 %v1270, %v1271
      %v1273 = vrot.slane %v1272, 4
      %v1274 = vadd.f32 %v1272, %v1273
      %v1275 = vrot.slane %v1274, 2
      %v1276 = vadd.f32 %v1274, %v1275
      %v1277 = vrot.slane %v1276, 1
      %v1278 = vadd.f32 %v1276, %v1277
      %v1279 = vsel %vm644, %v1214, 0.0
      %v1280 = vsel %vm644, %v1215, 0.0
      %v1281 = vadd.f32 %v1279, %v1280
      %v1282 = vrot.slane %v1281, 4
      %v1283 = vadd.f32 %v1281, %v1282
      %v1284 = vrot.slane %v1283, 2
      %v1285 = vadd.f32 %v1283, %v1284
      %v1286 = vrot.slane %v1285, 1
      %v1287 = vadd.f32 %v1285, %v1286
      %vm1296 = vcmask 1041409
      %v1297 = vsel %vm1296, %v1233, %v1224
      %vm1298 = vcmask 1042434
      %v1299 = vsel %vm1298, %v1242, %v1297
      %vm1300 = vcmask 1043459
      %v1301 = vsel %vm1300, %v1251, %v1299
      %vm1302 = vcmask 1044484
      %v1303 = vsel %vm1302, %v1260, %v1301
      %vm1304 = vcmask 1045509
      %v1305 = vsel %vm1304, %v1269, %v1303
      %vm1306 = vcmask 1046534
      %v1307 = vsel %vm1306, %v1278, %v1305
      %vm1308 = vcmask 1047559
      %v1309 = vsel %vm1308, %v1287, %v1307
      %1311 = vst.msk [vmem:[#allocation9] sm:$0xff] %vm644, %v1309
      %v1312 = vld [vmem:[#allocation9] sm:$0xff]
      %v1313 = vld [vmem:[%s12] sm:$0x1]
      %v1315 = vperm.slane %v1313, 0
      %v1317 = vmul.f32 %v1315, %v610
      %v1318 = vadd.f32 %v1312, %v1317
      %v1319 = vxor.u32 %v554, 2147483648
      %v1320 = vmul.f32 %v1319, 1.442695
      %v1321 = vpow.pop %v1320
      %v1322 = vadd.f32 %v1321, 1.0
      %v1323 = vrcp.pop %v1322
      %v1324 = vmul.f32 %v1322, %v1323
      %v1325 = vsub.f32 1.0, %v1324
      %v1326 = vmul.f32 %v1323, %v1325
      %v1327 = vadd.f32 %v1323, %v1326
      %vm1328 = vweird.f32 %v1322
      %vm1329 = vweird.f32 %v1323
      %vm1330 = vmor %vm1328, %vm1329
      %v1331 = vsel %vm1330, %v1323, %v1327
      %v1332 = vand.u32 2147483647, %v1322
      %vm1333 = vcmp.eq.f32.partialorder %v1332, 8.507059e+37
      %v1334 = vand.u32 %v1322, 2147483648
      %v1335 = vor.u32 1.1754944e-38, %v1334
      %v1336 = vsel %vm1333, %v1335, %v1331
      %v1337 = vmul.f32 1.0, %v1336
      %v1338 = vmul.f32 %v554, %v1337
      %v1339 = vmul.f32 %v1318, %v1338
      %v1340 = vpack.c.bf16 %v1339, %v1339
      %v1341 = vld [vmem:[%s13] sm:$0xf]
      %v1342 = vld [vmem:[%s13 + $0x4] sm:$0xf]
      %v1343 = vld [vmem:[%s13 + $0x8] sm:$0xf]
      %v1344 = vld [vmem:[%s13 + $0xc] sm:$0xf]
      %v1345 = vld [vmem:[%s13 + $0x10] sm:$0xf]
      %v1346 = vld [vmem:[%s13 + $0x14] sm:$0xf]
      %v1347 = vld [vmem:[%s13 + $0x18] sm:$0xf]
      %v1348 = vld [vmem:[%s13 + $0x1c] sm:$0xf]
      %v1357 = vunpack.c.l.b16 %v1341
      %v1358 = vunpack.c.l.b16 %v1342
      %v1359 = vunpack.c.l.b16 %v1343
      %v1360 = vunpack.c.l.b16 %v1344
      %v1361 = vunpack.c.l.b16 %v1345
      %v1362 = vunpack.c.l.b16 %v1346
      %v1363 = vunpack.c.l.b16 %v1347
      %v1364 = vunpack.c.l.b16 %v1348
      %v1365 = vpack.c.b16 %v1358, %v1357
      %v1366 = vpack.c.b16 %v1360, %v1359
      %v1367 = vpack.c.b16 %v1362, %v1361
      %v1368 = vpack.c.b16 %v1364, %v1363
      %v1374 = vsel %vm644, %v1340, 0
      %1376 = vmatpush.bf16.msra.mxu0 0
      %1377 = vmatpush.bf16.msra.mxu0 0
      %1378 = vmatpush.bf16.msra.mxu0 0
      %1379 = vmatpush.bf16.msra.mxu0 0
      %1380 = vmatpush.bf16.msra.mxu0 %v1368
      %1381 = vmatpush.bf16.msra.mxu0 %v1367
      %1382 = vmatpush.bf16.msra.mxu0 %v1366
      %1383 = vmatpush.bf16.msra.mxu0 %v1365
      %1384 = vmatmul.bf16.gmra.mxu0 %v1374
      %v1385 = vpop.f32.mrf.mxu0
      %v1386 = vadd.f32 0.0, %v1385
      %v1387 = vpop.f32.mrf.mxu0
      %1388 = vdwg.mxu0
      %v1389 = vadd.f32 %v464, %v1386
      %1390 = vst.msk [vmem:[%s462] sm:$0xff] %vm466, %v1389
      %p1391 = scmp.lt.s32.totalorder %s25, 1
      %s1392 = scalar_select %p1391, %s25, 1
      %s1393 = smul.addr %s1392, 8
      %s1394 = scalar_lea.vmem %s14, %s1393
      // Predicated region
      $region84: #{net_forward.5} parent=75 // pred_check
        %p1395 = pneg %p342
      $region85: #{net_forward.5} parent=75 // pred_check_branch
        %1397 = sbr.rel (%p1395) target = $region87
      $region86: #{net_forward.5} parent=75 // pred_region
        _
      $region87: #{net_forward.5} parent=75 // pred_fallthru
        _
    $region76: #{net_forward.5} parent=5 // pred_fallthru
      _
    %p1398 = scmp.le.s32.totalorder 2, %s20
    // Predicated region
    $region88: #{net_forward.5} parent=5 // pred_check
      %p1399 = pneg %p1398
    $region89: #{net_forward.5} parent=5 // pred_check_branch
      %1401 = sbr.rel (%p1399) target = $region91
    $region90: #{net_forward.5} parent=5 // pred_region
      %s1402 = ssub.s32 %s20, 2
      // Predicated region
      $region92: #{net_forward.5} parent=90 // pred_check
        %p1403 = pneg %p348
      $region93: #{net_forward.5} parent=90 // pred_check_branch
        %1405 = sbr.rel (%p1403) target = $region95
      $region94: #{net_forward.5} parent=90 // pred_region
        %p1406 = scmp.lt.s32.totalorder %s26, 1
        %s1407 = scalar_select %p1406, %s26, 1
        %s1408 = smul.addr %s1407, 8
        %s1409 = scalar_lea.vmem %s14, %s1408
      $region95: #{net_forward.5} parent=90 // pred_fallthru
        _
    $region91: #{net_forward.5} parent=5 // pred_fallthru
      _
  $region6: #{net_forward.5} parent=0 // loop_footer
    %s24 = sadd.s32 1, %s20
  $region7: #{net_forward.5} parent=0 // loop_footer_branch
    %19 = sbr.rel target = $region3
  $region8: #{net_forward.5} parent=0 // loop_exit
    _

</llo_original>
